<compile_context>
chip_gen: v6e
topology: v6e:2x2x1
jax: 0.10.0
libtpu: 0.0.40
codegen_flags: <defaults>
</compile_context>

<pallas_src>
import jax
import jax.numpy as jnp
import numpy as np
from jax.experimental import pallas as pl
from jax.experimental.pallas import tpu as pltpu


def _vmem_cap_bytes():
    """~75% of physical VMEM: ~48 MiB on v7x, ~96 MiB on v5e/v6e."""
    phys = 64 << 20                       # conservative default = v7x physical
    try:
        phys = int(pltpu.get_tpu_info().vmem_capacity_bytes)
    except Exception:
        pass
    return (phys * 3) // 4


def _collapse_permutation(shape, dims):
    """Collapse runs of consecutive input axes that stay adjacent in the output.

    Returns (coarse_in_shape, coarse_dims) such that
        transpose(x.reshape(coarse_in_shape), coarse_dims).reshape(out_shape)
    equals transpose(x, dims).
    """
    runs = []
    for d in dims:
        if runs and d == runs[-1][-1] + 1:
            runs[-1].append(d)
        else:
            runs.append([d])
    order = sorted(range(len(runs)), key=lambda r: runs[r][0])
    coarse_in_shape = tuple(
        int(np.prod([shape[a] for a in runs[r]], dtype=np.int64)) for r in order
    )
    inv = {r: i for i, r in enumerate(order)}          # run index -> coarse input axis
    coarse_dims = tuple(inv[r] for r in range(len(runs)))
    return coarse_in_shape, coarse_dims


def _largest_divisor_leq(n, limit, multiple_of=1, lane_rest=1):
    """Largest divisor of n that is <= limit, a multiple of `multiple_of`, and keeps
    the flattened output chunk (divisor * lane_rest) 128-lane aligned."""
    best = None
    d = 1
    while d * d <= n:
        if n % d == 0:
            for c in (d, n // d):
                if (c <= limit and c % multiple_of == 0
                        and (c * lane_rest) % 128 == 0):
                    if best is None or c > best:
                        best = c
        d += 1
    return best


def _find_lead_tile(lead, rest_flat, itemsize, row_budget, pos, ndim_c):
    """Chunk size of the leading coarse *output* axis per grid step."""
    if lead * rest_flat * itemsize <= row_budget:
        return lead
    limit = max(1, row_budget // (rest_flat * itemsize))
    if pos == ndim_c - 1:
        # Tiled input axis is the lane axis: prefer >=2 KiB contiguous HBM
        # segments, fall back to the 128-lane block minimum.
        grans = (max(128, 2048 // itemsize), 128)
    elif pos == ndim_c - 2:
        # Dtype-aware sublane granularity (8 for f32, 16 bf16, 32 int8).
        grans = (max(1, (8 * 4) // itemsize),)
    else:
        grans = (1,)
    for g in grans:
        cand = _largest_divisor_leq(lead, limit, multiple_of=g, lane_rest=rest_flat)
        if cand is not None:
            return cand
    return lead    # no legal split; caller's VMEM fit-check decides what to do


def _padded_bytes(shape, itemsize, sublane_mult):
    """VMEM footprint of a tile after (sublane, 128-lane) padding."""
    dims = [int(d) for d in shape]
    if len(dims) == 1:
        dims = [1] + dims
    dims[-1] = -(-dims[-1] // 128) * 128
    dims[-2] = -(-dims[-2] // sublane_mult) * sublane_mult
    return int(np.prod(dims, dtype=np.int64)) * itemsize


def _choose_tiling(coarse_in_shape, pos, trailing_perm, itemsize, target):
    """Pick (tb, lead_tile) for one target block size and estimate VMEM use."""
    ndim_c = len(coarse_in_shape)
    n_batch = coarse_in_shape[0]
    trailing_in = coarse_in_shape[1:]
    flat = int(np.prod(trailing_in, dtype=np.int64))
    lead = trailing_in[pos - 1]
    rest_flat = flat // lead

    # Rows per step needed for sublane alignment of the flat output block.
    min_tb = n_batch if n_batch < 8 else 8
    per_row_budget = max(128 * itemsize, target // min_tb)

    lead_tile = _find_lead_tile(lead, rest_flat, itemsize, per_row_budget, pos, ndim_c)
    chunk_cols = lead_tile * rest_flat
    chunk_bytes = chunk_cols * itemsize

    if n_batch * chunk_bytes <= target:
        tb = n_batch
    else:
        q = target // chunk_bytes
        if q >= 8:
            tb = min(n_batch, (q // 8) * 8)     # multiple of 8 (sublane-aligned)
        else:
            tb = min_tb                          # 8, or the full (small) batch

    in_block = [tb] + list(trailing_in)
    in_block[pos] = lead_tile
    in_block = tuple(in_block)
    t_shape = (tb,) + tuple(in_block[1:][p] for p in trailing_perm)
    out_block = (tb, chunk_cols)

    sub = max(1, (8 * 4) // itemsize)
    in_pad = _padded_bytes(in_block, itemsize, sub)
    out_pad = _padded_bytes(out_block, itemsize, sub)
    t_pad = _padded_bytes(t_shape, itemsize, sub)   # lane-padded transpose tile
    # 2x double-buffered in/out + transpose intermediate + reshape copy + headroom.
    vmem_needed = 2 * in_pad + 2 * out_pad + t_pad + out_pad + (2 << 20)

    return dict(tb=tb, lead_tile=lead_tile, chunk_cols=chunk_cols,
                in_block=in_block, out_block=out_block, vmem_needed=vmem_needed)


def _make_permute_kernel(trailing_perm, out_cols):
    full_perm = (0,) + tuple(p + 1 for p in trailing_perm)

    def kernel(x_ref, o_ref):
        # One trailing-axes transpose (XLU) of the coarse tile, flattened so the
        # store is a single lane-dense (tb, out_cols) slab.
        # TODO(synk): fuse the transpose+reshape into one pltpu.einshape relayout
        #             and pack bf16/int8 pairs/quads via pltpu.bitcast to cut XLU
        #             traffic on v6e/v7x.
        t = jnp.transpose(x_ref[...], full_perm)
        o_ref[...] = t.reshape(t.shape[0], out_cols)

    return kernel


def permute_pallas(x, dims, *, min_pallas_bytes=256 << 10):
    """Pallas equivalent of torch.permute(x, dims)."""
    ndim = x.ndim
    dims = tuple(int(d) % ndim for d in dims)
    assert len(dims) == ndim and sorted(dims) == list(range(ndim)), dims

    out_shape_full = tuple(x.shape[d] for d in dims)
    if ndim <= 1 or dims == tuple(range(ndim)):
        return x
    if x.size == 0:
        return jnp.transpose(x, dims)
    if x.nbytes <= min_pallas_bytes:
        # Tiny input: single-step pallas_call fixed cost dominates; XLA wins.
        return jnp.transpose(x, dims)

    coarse_in_shape, coarse_dims = _collapse_permutation(x.shape, dims)
    if len(coarse_dims) <= 1 or coarse_dims == tuple(range(len(coarse_dims))):
        return x.reshape(out_shape_full)

    # If the leading coarse input axis does not stay leading, prepend a dummy
    # batch axis so one code path handles every permutation.
    if coarse_dims[0] != 0:
        coarse_in_shape = (1,) + coarse_in_shape
        coarse_dims = (0,) + tuple(d + 1 for d in coarse_dims)

    ndim_c = len(coarse_in_shape)
    n_batch = coarse_in_shape[0]
    trailing_in = coarse_in_shape[1:]
    trailing_perm = tuple(d - 1 for d in coarse_dims[1:])
    flat = int(np.prod(trailing_in, dtype=np.int64))
    itemsize = x.dtype.itemsize
    pos = coarse_dims[1]                 # coarse *input* axis tiled by grid axis j
    lead = trailing_in[pos - 1]          # leading coarse *output* axis size

    cap = _vmem_cap_bytes()
    target = min(8 << 20, max(512 << 10, cap // 6))   # ~8 MiB blocks when VMEM allows

    cfg = None
    t_bytes = target
    floor = max(64 << 10, 128 * 128 * itemsize)
    while t_bytes >= floor:
        cand = _choose_tiling(coarse_in_shape, pos, trailing_perm, itemsize, t_bytes)
        if cand["vmem_needed"] <= cap:
            cfg = cand
            break
        t_bytes //= 2
    if cfg is None:
        # TODO(synk): add a third grid axis over the minor trailing output axis so
        # pathologically shaped permutes (huge un-splittable rows) still fit VMEM.
        return jnp.transpose(x, dims)

    tb = cfg["tb"]
    lead_tile = cfg["lead_tile"]
    chunk_cols = cfg["chunk_cols"]
    in_block = cfg["in_block"]
    out_block = cfg["out_block"]
    grid = (pl.cdiv(n_batch, tb), pl.cdiv(lead, lead_tile))

    def in_index_map(b, j):
        idx = [0] * ndim_c
        idx[0] = b
        idx[pos] = j
        return tuple(idx)

    def out_index_map(b, j):
        return (b, j)

    vmem_limit = int(min(cap, max(cfg["vmem_needed"], 32 << 20)))

    x_coarse = x.reshape(coarse_in_shape)          # contiguous reshape -> free
    flat_out = pl.pallas_call(
        _make_permute_kernel(trailing_perm, chunk_cols),
        out_shape=jax.ShapeDtypeStruct((n_batch, flat), x.dtype),
        grid=grid,
        in_specs=[pl.BlockSpec(in_block, in_index_map)],
        out_specs=pl.BlockSpec(out_block, out_index_map),
        compiler_params=pltpu.CompilerParams(
            # Both axes write disjoint output tiles -> shardable across v7x's 2 TCs.
            dimension_semantics=("parallel", "parallel"),
            vmem_limit_bytes=vmem_limit,
        ),
        cost_estimate=pl.CostEstimate(
            flops=0, transcendentals=0, bytes_accessed=int(2 * x.nbytes)),
    )(x_coarse)

    return flat_out.reshape(out_shape_full)        # contiguous reshape -> free


if __name__ == "__main__":
    dims = (0, 2, 3, 1)  # NCHW -> NHWC (the module's configured permutation)

    key = jax.random.PRNGKey(0)
    x = jax.random.normal(key, (2, 4, 16, 16), dtype=jnp.float32)

    # Force the Pallas path (the production default short-circuits tiny inputs
    # to XLA's native transpose, per the perf review).
    out = jax.block_until_ready(permute_pallas(x, dims, min_pallas_bytes=0))
    ref = jnp.transpose(x, dims)
    assert out.shape == ref.shape, (out.shape, ref.shape)
    assert out.dtype == ref.dtype, (out.dtype, ref.dtype)
    np.testing.assert_array_equal(np.asarray(out), np.asarray(ref))

    # Extra coverage of the generic coarse-permutation paths (Pallas forced).
    for extra_dims in ((0, 3, 1, 2), (2, 3, 0, 1), (1, 0, 2, 3)):
        got = jax.block_until_ready(
            permute_pallas(x, extra_dims, min_pallas_bytes=0))
        np.testing.assert_array_equal(
            np.asarray(got), np.asarray(jnp.transpose(x, extra_dims)))

    # Default path: tiny input takes the XLA fast path and must still match.
    fast = jax.block_until_ready(permute_pallas(x, dims))
    np.testing.assert_array_equal(np.asarray(fast), np.asarray(ref))

    print("KERNEL_OK")
</pallas_src>

<mosaic_0001>
module attributes {stable_mosaic.version = 11 : i64} {
  func.func @kernel(%arg0: i32, %arg1: i32, %arg2: memref<2x4x256xf32, #tpu.memory_space<vmem>>, %arg3: memref<2x1024xf32, #tpu.memory_space<vmem>>) attributes {dimension_semantics = [#tpu.dimension_semantics<parallel>, #tpu.dimension_semantics<parallel>], iteration_bounds = array<i64: 1, 1>, scalar_prefetch = 0 : i64, scratch_operands = 0 : i64, tpu.core_type = #tpu.core_type<tc>, window_params = [{transform_indices = @transform_0, window_bounds = array<i64: 2, 4, 256>}, {transform_indices = @transform_1, window_bounds = array<i64: 2, 1024>}]} {
    %c0 = arith.constant 0 : index
    %c0_0 = arith.constant 0 : index
    %c0_1 = arith.constant 0 : index
    %0 = vector.load %arg2[%c0, %c0_0, %c0_1] : memref<2x4x256xf32, #tpu.memory_space<vmem>>, vector<2x4x256xf32>
    %1 = tpu.transpose %0, [0, 2, 1] : vector<2x4x256xf32> -> vector<2x256x4xf32>
    %2 = vector.shape_cast %1 : vector<2x256x4xf32> to vector<2x1024xf32>
    %c0_2 = arith.constant 0 : index
    %c0_3 = arith.constant 0 : index
    %3 = vector.load %arg3[%c0_2, %c0_3] : memref<2x1024xf32, #tpu.memory_space<vmem>>, vector<2x1024xf32>
    tpu.vector_store %arg3[%c0_2, %c0_3], %2 {strides = array<i32>} : memref<2x1024xf32, #tpu.memory_space<vmem>>, vector<2x1024xf32>,
    return
  }
  func.func @transform_0(%arg0: i32, %arg1: i32) -> (i32, i32, i32) {
    %c0_i32 = arith.constant 0 : i32
    %c0_i32_0 = arith.constant 0 : i32
    return %arg0, %c0_i32, %arg1 : i32, i32, i32
  }
  func.func @transform_1(%arg0: i32, %arg1: i32) -> (i32, i32) {
    %c0_i32 = arith.constant 0 : i32
    return %arg0, %arg1 : i32, i32
  }
}

</mosaic_0001>

<llo_original>
// kernel: tpu_custom_call.1
$region0: #{tpu_custom_call.1}
  #allocation0 [shape = 'u32[]', space=smem, size = 0x4, offset = 0x4, fixed_abs, tag = 'smem constant byte address 0x4 - core index']
  #allocation1 [shape = 'u32[144,128]{1,0:T(1,128)}', space=vmem, size = 0x12000, scoped, tag = 'internal scratch']
  %s0 = inlined_call_operand.hbm [shape: f32[2,4,256], index: 0, kind: input, shape index: {}]
  %s1 = inlined_call_operand.hbm [shape: f32[2,1024], index: 1, kind: output, shape index: {}]
  %s2 = sld [smem:[#allocation0]]
  $region18: #{tpu_custom_call.1} parent=0
    _
  %s4 = ssub.s32 1, %s2
  %s5 = scalar_select 0, %s4, %s2
  $region1: #{tpu_custom_call.1} parent=0
    #allocation2 [shape = 'u8[8192]{0}', space=vmem, size = 0x2000, scoped, tag = 'input window, operand 0, single buffered']
    #allocation3 [shape = 's32[1]{0}', space=sflag, size = 0x4, scoped, tag = 'scoped memory for tpu_custom_call.1']
    #allocation4 [shape = 's32[1]{0}', space=sflag, size = 0x4, scoped, tag = 'scoped memory for tpu_custom_call.1']
    #allocation5 [shape = 'u8[8192]{0}', space=vmem, size = 0x2000, scoped, tag = 'output window, operand 0, single buffered']
    %6 = vsyncpa [#allocation3], 0
    %7 = vsyncpa [#allocation4], 0
    // Predicated region
    $region2: #{tpu_custom_call.1} parent=1 // pred_check
      _
    $region3: #{tpu_custom_call.1} parent=1 // pred_check_branch
      %9 = sbr.rel (0) target = $region5
    $region4: #{tpu_custom_call.1} parent=1 // pred_region
      %s11 = ssub.s32 256, 256
      %12 = vsyncadd [#allocation3], %s11
      %s13 = sshll.u32 [#allocation2], 4
      %s14 = int_to_ptr.vmem [resolvable:$true] %s13
      %19 = dma.hbm_to_vmem [thread:$0]  %s0, 256, %s14, [#allocation3], 128, 128, 8
    $region5: #{tpu_custom_call.1} parent=1 // pred_fallthru
      _
    // Predicated region
    $region6: #{tpu_custom_call.1} parent=1 // pred_check
      _
    $region7: #{tpu_custom_call.1} parent=1 // pred_check_branch
      %21 = sbr.rel (0) target = $region9
    $region8: #{tpu_custom_call.1} parent=1 // pred_region
      %22 = dma.done [#allocation3], 256
    $region9: #{tpu_custom_call.1} parent=1 // pred_fallthru
      _
    %v23 = vld [vmem:[#allocation2] sm:$0xff]
    %v24 = vld [vmem:[#allocation2 + $0x8] sm:$0xff]
    %v27 = vcombine.high %v23, %v23
    %v28 = vcombine.high %v24, %v24
    %31 = vxpose.xlu0.b32.start [1/16] %v23, 128
    %32 = vxpose.xlu0.b32.cont [2/16] 0.0, 128
    %33 = vxpose.xlu0.b32.cont [3/16] 0.0, 128
    %34 = vxpose.xlu0.b32.cont [4/16] 0.0, 128
    %35 = vxpose.xlu0.b32.cont [5/16] 0.0, 128
    %36 = vxpose.xlu0.b32.cont [6/16] 0.0, 128
    %37 = vxpose.xlu0.b32.cont [7/16] 0.0, 128
    %38 = vxpose.xlu0.b32.cont [8/16] 0.0, 128
    %39 = vxpose.xlu0.b32.cont [9/16] 0.0, 128
    %40 = vxpose.xlu0.b32.cont [10/16] 0.0, 128
    %41 = vxpose.xlu0.b32.cont [11/16] 0.0, 128
    %42 = vxpose.xlu0.b32.cont [12/16] 0.0, 128
    %43 = vxpose.xlu0.b32.cont [13/16] 0.0, 128
    %44 = vxpose.xlu0.b32.cont [14/16] 0.0, 128
    %45 = vxpose.xlu0.b32.cont [15/16] 0.0, 128
    %46 = vxpose.xlu0.b32.end [16/16] 0.0, 128
    %v47 = vpop.trf.xlu0
    %v48 = vpop.trf.xlu0
    %v49 = vpop.trf.xlu0
    %v50 = vpop.trf.xlu0
    %v51 = vpop.trf.xlu0
    %v52 = vpop.trf.xlu0
    %v53 = vpop.trf.xlu0
    %v54 = vpop.trf.xlu0
    %v55 = vpop.trf.xlu0
    %v56 = vpop.trf.xlu0
    %v57 = vpop.trf.xlu0
    %v58 = vpop.trf.xlu0
    %v59 = vpop.trf.xlu0
    %v60 = vpop.trf.xlu0
    %v61 = vpop.trf.xlu0
    %v62 = vpop.trf.xlu0
    %63 = vxpose.xlu0.b32.start [1/16] %v27, 128
    %64 = vxpose.xlu0.b32.cont [2/16] 0.0, 128
    %65 = vxpose.xlu0.b32.cont [3/16] 0.0, 128
    %66 = vxpose.xlu0.b32.cont [4/16] 0.0, 128
    %67 = vxpose.xlu0.b32.cont [5/16] 0.0, 128
    %68 = vxpose.xlu0.b32.cont [6/16] 0.0, 128
    %69 = vxpose.xlu0.b32.cont [7/16] 0.0, 128
    %70 = vxpose.xlu0.b32.cont [8/16] 0.0, 128
    %71 = vxpose.xlu0.b32.cont [9/16] 0.0, 128
    %72 = vxpose.xlu0.b32.cont [10/16] 0.0, 128
    %73 = vxpose.xlu0.b32.cont [11/16] 0.0, 128
    %74 = vxpose.xlu0.b32.cont [12/16] 0.0, 128
    %75 = vxpose.xlu0.b32.cont [13/16] 0.0, 128
    %76 = vxpose.xlu0.b32.cont [14/16] 0.0, 128
    %77 = vxpose.xlu0.b32.cont [15/16] 0.0, 128
    %78 = vxpose.xlu0.b32.end [16/16] 0.0, 128
    %v79 = vpop.trf.xlu0
    %v80 = vpop.trf.xlu0
    %v81 = vpop.trf.xlu0
    %v82 = vpop.trf.xlu0
    %v83 = vpop.trf.xlu0
    %v84 = vpop.trf.xlu0
    %v85 = vpop.trf.xlu0
    %v86 = vpop.trf.xlu0
    %v87 = vpop.trf.xlu0
    %v88 = vpop.trf.xlu0
    %v89 = vpop.trf.xlu0
    %v90 = vpop.trf.xlu0
    %v91 = vpop.trf.xlu0
    %v92 = vpop.trf.xlu0
    %v93 = vpop.trf.xlu0
    %v94 = vpop.trf.xlu0
    %95 = vxpose.xlu0.b32.start [1/16] %v24, 128
    %96 = vxpose.xlu0.b32.cont [2/16] 0.0, 128
    %97 = vxpose.xlu0.b32.cont [3/16] 0.0, 128
    %98 = vxpose.xlu0.b32.cont [4/16] 0.0, 128
    %99 = vxpose.xlu0.b32.cont [5/16] 0.0, 128
    %100 = vxpose.xlu0.b32.cont [6/16] 0.0, 128
    %101 = vxpose.xlu0.b32.cont [7/16] 0.0, 128
    %102 = vxpose.xlu0.b32.cont [8/16] 0.0, 128
    %103 = vxpose.xlu0.b32.cont [9/16] 0.0, 128
    %104 = vxpose.xlu0.b32.cont [10/16] 0.0, 128
    %105 = vxpose.xlu0.b32.cont [11/16] 0.0, 128
    %106 = vxpose.xlu0.b32.cont [12/16] 0.0, 128
    %107 = vxpose.xlu0.b32.cont [13/16] 0.0, 128
    %108 = vxpose.xlu0.b32.cont [14/16] 0.0, 128
    %109 = vxpose.xlu0.b32.cont [15/16] 0.0, 128
    %110 = vxpose.xlu0.b32.end [16/16] 0.0, 128
    %v111 = vpop.trf.xlu0
    %v112 = vpop.trf.xlu0
    %v113 = vpop.trf.xlu0
    %v114 = vpop.trf.xlu0
    %v115 = vpop.trf.xlu0
    %v116 = vpop.trf.xlu0
    %v117 = vpop.trf.xlu0
    %v118 = vpop.trf.xlu0
    %v119 = vpop.trf.xlu0
    %v120 = vpop.trf.xlu0
    %v121 = vpop.trf.xlu0
    %v122 = vpop.trf.xlu0
    %v123 = vpop.trf.xlu0
    %v124 = vpop.trf.xlu0
    %v125 = vpop.trf.xlu0
    %v126 = vpop.trf.xlu0
    %127 = vxpose.xlu0.b32.start [1/16] %v28, 128
    %128 = vxpose.xlu0.b32.cont [2/16] 0.0, 128
    %129 = vxpose.xlu0.b32.cont [3/16] 0.0, 128
    %130 = vxpose.xlu0.b32.cont [4/16] 0.0, 128
    %131 = vxpose.xlu0.b32.cont [5/16] 0.0, 128
    %132 = vxpose.xlu0.b32.cont [6/16] 0.0, 128
    %133 = vxpose.xlu0.b32.cont [7/16] 0.0, 128
    %134 = vxpose.xlu0.b32.cont [8/16] 0.0, 128
    %135 = vxpose.xlu0.b32.cont [9/16] 0.0, 128
    %136 = vxpose.xlu0.b32.cont [10/16] 0.0, 128
    %137 = vxpose.xlu0.b32.cont [11/16] 0.0, 128
    %138 = vxpose.xlu0.b32.cont [12/16] 0.0, 128
    %139 = vxpose.xlu0.b32.cont [13/16] 0.0, 128
    %140 = vxpose.xlu0.b32.cont [14/16] 0.0, 128
    %141 = vxpose.xlu0.b32.cont [15/16] 0.0, 128
    %142 = vxpose.xlu0.b32.end [16/16] 0.0, 128
    %v143 = vpop.trf.xlu0
    %v144 = vpop.trf.xlu0
    %v145 = vpop.trf.xlu0
    %v146 = vpop.trf.xlu0
    %v147 = vpop.trf.xlu0
    %v148 = vpop.trf.xlu0
    %v149 = vpop.trf.xlu0
    %v150 = vpop.trf.xlu0
    %v151 = vpop.trf.xlu0
    %v152 = vpop.trf.xlu0
    %v153 = vpop.trf.xlu0
    %v154 = vpop.trf.xlu0
    %v155 = vpop.trf.xlu0
    %v156 = vpop.trf.xlu0
    %v157 = vpop.trf.xlu0
    %v158 = vpop.trf.xlu0
    %v159 = vcombine.high %v47, 0.0
    %v161 = vunpack.c.l.s4 1983009808
    %v162 = vunpack.c.0.s8 %v161
    %v163 = vlaneseq
    %v164 = vshrl.u32 %v163, 7
    %v165 = vsub.s32 %v162, %v164
    %v166 = vrot.slane %v47, %v165
    %v168 = vunpack.c.l.s4 1983009808
    %v169 = vunpack.c.0.s8 %v168
    %v170 = vlaneseq
    %v171 = vshrl.u32 %v170, 7
    %v172 = vsub.s32 %v169, %v171
    %v173 = vrot.slane %v159, %v172
    %v174 = vcombine.high %v111, 0.0
    %v176 = vunpack.c.l.s4 1983009808
    %v177 = vunpack.c.0.s8 %v176
    %v178 = vlaneseq
    %v179 = vshrl.u32 %v178, 7
    %v180 = vsub.s32 %v177, %v179
    %v181 = vrot.slane %v111, %v180
    %v183 = vunpack.c.l.s4 1983009808
    %v184 = vunpack.c.0.s8 %v183
    %v185 = vlaneseq
    %v186 = vshrl.u32 %v185, 7
    %v187 = vsub.s32 %v184, %v186
    %v188 = vrot.slane %v174, %v187
    %v189 = vcombine.low %v166, %v181
    %v190 = vcombine.high %v166, %v181
    %v192 = vunpack.c.l.s4 1934713408
    %v193 = vunpack.c.0.s8 %v192
    %v194 = vlaneseq
    %v195 = vshrl.u32 %v194, 7
    %v196 = vsub.s32 %v193, %v195
    %v197 = vrot.slane %v189, %v196
    %v199 = vunpack.c.l.s4 1934713408
    %v200 = vunpack.c.0.s8 %v199
    %v201 = vlaneseq
    %v202 = vshrl.u32 %v201, 7
    %v203 = vsub.s32 %v200, %v202
    %v204 = vrot.slane %v190, %v203
    %v205 = vcombine.low %v173, %v188
    %v206 = vcombine.high %v173, %v188
    %v208 = vunpack.c.l.s4 1934713408
    %v209 = vunpack.c.0.s8 %v208
    %v210 = vlaneseq
    %v211 = vshrl.u32 %v210, 7
    %v212 = vsub.s32 %v209, %v211
    %v213 = vrot.slane %v205, %v212
    %v215 = vunpack.c.l.s4 1934713408
    %v216 = vunpack.c.0.s8 %v215
    %v217 = vlaneseq
    %v218 = vshrl.u32 %v217, 7
    %v219 = vsub.s32 %v216, %v218
    %v220 = vrot.slane %v206, %v219
    %v221 = vcombine.high %v197, 0.0
    %v222 = vcombine.high %v204, 0.0
    %v223 = vcombine.high %v213, 0.0
    %v224 = vcombine.high %v220, 0.0
    %v225 = vcombine.high %v48, 0.0
    %v227 = vunpack.c.l.s4 1983009808
    %v228 = vunpack.c.0.s8 %v227
    %v229 = vlaneseq
    %v230 = vshrl.u32 %v229, 7
    %v231 = vsub.s32 %v228, %v230
    %v232 = vrot.slane %v48, %v231
    %v234 = vunpack.c.l.s4 1983009808
    %v235 = vunpack.c.0.s8 %v234
    %v236 = vlaneseq
    %v237 = vshrl.u32 %v236, 7
    %v238 = vsub.s32 %v235, %v237
    %v239 = vrot.slane %v225, %v238
    %v240 = vcombine.high %v112, 0.0
    %v242 = vunpack.c.l.s4 1983009808
    %v243 = vunpack.c.0.s8 %v242
    %v244 = vlaneseq
    %v245 = vshrl.u32 %v244, 7
    %v246 = vsub.s32 %v243, %v245
    %v247 = vrot.slane %v112, %v246
    %v249 = vunpack.c.l.s4 1983009808
    %v250 = vunpack.c.0.s8 %v249
    %v251 = vlaneseq
    %v252 = vshrl.u32 %v251, 7
    %v253 = vsub.s32 %v250, %v252
    %v254 = vrot.slane %v240, %v253
    %v255 = vcombine.low %v232, %v247
    %v256 = vcombine.high %v232, %v247
    %v258 = vunpack.c.l.s4 1934713408
    %v259 = vunpack.c.0.s8 %v258
    %v260 = vlaneseq
    %v261 = vshrl.u32 %v260, 7
    %v262 = vsub.s32 %v259, %v261
    %v263 = vrot.slane %v255, %v262
    %v265 = vunpack.c.l.s4 1934713408
    %v266 = vunpack.c.0.s8 %v265
    %v267 = vlaneseq
    %v268 = vshrl.u32 %v267, 7
    %v269 = vsub.s32 %v266, %v268
    %v270 = vrot.slane %v256, %v269
    %v271 = vcombine.low %v239, %v254
    %v272 = vcombine.high %v239, %v254
    %v274 = vunpack.c.l.s4 1934713408
    %v275 = vunpack.c.0.s8 %v274
    %v276 = vlaneseq
    %v277 = vshrl.u32 %v276, 7
    %v278 = vsub.s32 %v275, %v277
    %v279 = vrot.slane %v271, %v278
    %v281 = vunpack.c.l.s4 1934713408
    %v282 = vunpack.c.0.s8 %v281
    %v283 = vlaneseq
    %v284 = vshrl.u32 %v283, 7
    %v285 = vsub.s32 %v282, %v284
    %v286 = vrot.slane %v272, %v285
    %v287 = vcombine.high %v263, 0.0
    %v288 = vcombine.high %v270, 0.0
    %v289 = vcombine.high %v279, 0.0
    %v290 = vcombine.high %v286, 0.0
    %v291 = vcombine.high %v49, 0.0
    %v293 = vunpack.c.l.s4 1983009808
    %v294 = vunpack.c.0.s8 %v293
    %v295 = vlaneseq
    %v296 = vshrl.u32 %v295, 7
    %v297 = vsub.s32 %v294, %v296
    %v298 = vrot.slane %v49, %v297
    %v300 = vunpack.c.l.s4 1983009808
    %v301 = vunpack.c.0.s8 %v300
    %v302 = vlaneseq
    %v303 = vshrl.u32 %v302, 7
    %v304 = vsub.s32 %v301, %v303
    %v305 = vrot.slane %v291, %v304
    %v306 = vcombine.high %v113, 0.0
    %v308 = vunpack.c.l.s4 1983009808
    %v309 = vunpack.c.0.s8 %v308
    %v310 = vlaneseq
    %v311 = vshrl.u32 %v310, 7
    %v312 = vsub.s32 %v309, %v311
    %v313 = vrot.slane %v113, %v312
    %v315 = vunpack.c.l.s4 1983009808
    %v316 = vunpack.c.0.s8 %v315
    %v317 = vlaneseq
    %v318 = vshrl.u32 %v317, 7
    %v319 = vsub.s32 %v316, %v318
    %v320 = vrot.slane %v306, %v319
    %v321 = vcombine.low %v298, %v313
    %v322 = vcombine.high %v298, %v313
    %v324 = vunpack.c.l.s4 1934713408
    %v325 = vunpack.c.0.s8 %v324
    %v326 = vlaneseq
    %v327 = vshrl.u32 %v326, 7
    %v328 = vsub.s32 %v325, %v327
    %v329 = vrot.slane %v321, %v328
    %v331 = vunpack.c.l.s4 1934713408
    %v332 = vunpack.c.0.s8 %v331
    %v333 = vlaneseq
    %v334 = vshrl.u32 %v333, 7
    %v335 = vsub.s32 %v332, %v334
    %v336 = vrot.slane %v322, %v335
    %v337 = vcombine.low %v305, %v320
    %v338 = vcombine.high %v305, %v320
    %v340 = vunpack.c.l.s4 1934713408
    %v341 = vunpack.c.0.s8 %v340
    %v342 = vlaneseq
    %v343 = vshrl.u32 %v342, 7
    %v344 = vsub.s32 %v341, %v343
    %v345 = vrot.slane %v337, %v344
    %v347 = vunpack.c.l.s4 1934713408
    %v348 = vunpack.c.0.s8 %v347
    %v349 = vlaneseq
    %v350 = vshrl.u32 %v349, 7
    %v351 = vsub.s32 %v348, %v350
    %v352 = vrot.slane %v338, %v351
    %v353 = vcombine.high %v329, 0.0
    %v354 = vcombine.high %v336, 0.0
    %v355 = vcombine.high %v345, 0.0
    %v356 = vcombine.high %v352, 0.0
    %v357 = vcombine.high %v50, 0.0
    %v359 = vunpack.c.l.s4 1983009808
    %v360 = vunpack.c.0.s8 %v359
    %v361 = vlaneseq
    %v362 = vshrl.u32 %v361, 7
    %v363 = vsub.s32 %v360, %v362
    %v364 = vrot.slane %v50, %v363
    %v366 = vunpack.c.l.s4 1983009808
    %v367 = vunpack.c.0.s8 %v366
    %v368 = vlaneseq
    %v369 = vshrl.u32 %v368, 7
    %v370 = vsub.s32 %v367, %v369
    %v371 = vrot.slane %v357, %v370
    %v372 = vcombine.high %v114, 0.0
    %v374 = vunpack.c.l.s4 1983009808
    %v375 = vunpack.c.0.s8 %v374
    %v376 = vlaneseq
    %v377 = vshrl.u32 %v376, 7
    %v378 = vsub.s32 %v375, %v377
    %v379 = vrot.slane %v114, %v378
    %v381 = vunpack.c.l.s4 1983009808
    %v382 = vunpack.c.0.s8 %v381
    %v383 = vlaneseq
    %v384 = vshrl.u32 %v383, 7
    %v385 = vsub.s32 %v382, %v384
    %v386 = vrot.slane %v372, %v385
    %v387 = vcombine.low %v364, %v379
    %v388 = vcombine.high %v364, %v379
    %v390 = vunpack.c.l.s4 1934713408
    %v391 = vunpack.c.0.s8 %v390
    %v392 = vlaneseq
    %v393 = vshrl.u32 %v392, 7
    %v394 = vsub.s32 %v391, %v393
    %v395 = vrot.slane %v387, %v394
    %v397 = vunpack.c.l.s4 1934713408
    %v398 = vunpack.c.0.s8 %v397
    %v399 = vlaneseq
    %v400 = vshrl.u32 %v399, 7
    %v401 = vsub.s32 %v398, %v400
    %v402 = vrot.slane %v388, %v401
    %v403 = vcombine.low %v371, %v386
    %v404 = vcombine.high %v371, %v386
    %v406 = vunpack.c.l.s4 1934713408
    %v407 = vunpack.c.0.s8 %v406
    %v408 = vlaneseq
    %v409 = vshrl.u32 %v408, 7
    %v410 = vsub.s32 %v407, %v409
    %v411 = vrot.slane %v403, %v410
    %v413 = vunpack.c.l.s4 1934713408
    %v414 = vunpack.c.0.s8 %v413
    %v415 = vlaneseq
    %v416 = vshrl.u32 %v415, 7
    %v417 = vsub.s32 %v414, %v416
    %v418 = vrot.slane %v404, %v417
    %v419 = vcombine.high %v395, 0.0
    %v420 = vcombine.high %v402, 0.0
    %v421 = vcombine.high %v411, 0.0
    %v422 = vcombine.high %v418, 0.0
    %v423 = vcombine.high %v51, 0.0
    %v425 = vunpack.c.l.s4 1983009808
    %v426 = vunpack.c.0.s8 %v425
    %v427 = vlaneseq
    %v428 = vshrl.u32 %v427, 7
    %v429 = vsub.s32 %v426, %v428
    %v430 = vrot.slane %v51, %v429
    %v432 = vunpack.c.l.s4 1983009808
    %v433 = vunpack.c.0.s8 %v432
    %v434 = vlaneseq
    %v435 = vshrl.u32 %v434, 7
    %v436 = vsub.s32 %v433, %v435
    %v437 = vrot.slane %v423, %v436
    %v438 = vcombine.high %v115, 0.0
    %v440 = vunpack.c.l.s4 1983009808
    %v441 = vunpack.c.0.s8 %v440
    %v442 = vlaneseq
    %v443 = vshrl.u32 %v442, 7
    %v444 = vsub.s32 %v441, %v443
    %v445 = vrot.slane %v115, %v444
    %v447 = vunpack.c.l.s4 1983009808
    %v448 = vunpack.c.0.s8 %v447
    %v449 = vlaneseq
    %v450 = vshrl.u32 %v449, 7
    %v451 = vsub.s32 %v448, %v450
    %v452 = vrot.slane %v438, %v451
    %v453 = vcombine.low %v430, %v445
    %v454 = vcombine.high %v430, %v445
    %v456 = vunpack.c.l.s4 1934713408
    %v457 = vunpack.c.0.s8 %v456
    %v458 = vlaneseq
    %v459 = vshrl.u32 %v458, 7
    %v460 = vsub.s32 %v457, %v459
    %v461 = vrot.slane %v453, %v460
    %v463 = vunpack.c.l.s4 1934713408
    %v464 = vunpack.c.0.s8 %v463
    %v465 = vlaneseq
    %v466 = vshrl.u32 %v465, 7
    %v467 = vsub.s32 %v464, %v466
    %v468 = vrot.slane %v454, %v467
    %v469 = vcombine.low %v437, %v452
    %v470 = vcombine.high %v437, %v452
    %v472 = vunpack.c.l.s4 1934713408
    %v473 = vunpack.c.0.s8 %v472
    %v474 = vlaneseq
    %v475 = vshrl.u32 %v474, 7
    %v476 = vsub.s32 %v473, %v475
    %v477 = vrot.slane %v469, %v476
    %v479 = vunpack.c.l.s4 1934713408
    %v480 = vunpack.c.0.s8 %v479
    %v481 = vlaneseq
    %v482 = vshrl.u32 %v481, 7
    %v483 = vsub.s32 %v480, %v482
    %v484 = vrot.slane %v470, %v483
    %v485 = vcombine.high %v461, 0.0
    %v486 = vcombine.high %v468, 0.0
    %v487 = vcombine.high %v477, 0.0
    %v488 = vcombine.high %v484, 0.0
    %v489 = vcombine.high %v52, 0.0
    %v491 = vunpack.c.l.s4 1983009808
    %v492 = vunpack.c.0.s8 %v491
    %v493 = vlaneseq
    %v494 = vshrl.u32 %v493, 7
    %v495 = vsub.s32 %v492, %v494
    %v496 = vrot.slane %v52, %v495
    %v498 = vunpack.c.l.s4 1983009808
    %v499 = vunpack.c.0.s8 %v498
    %v500 = vlaneseq
    %v501 = vshrl.u32 %v500, 7
    %v502 = vsub.s32 %v499, %v501
    %v503 = vrot.slane %v489, %v502
    %v504 = vcombine.high %v116, 0.0
    %v506 = vunpack.c.l.s4 1983009808
    %v507 = vunpack.c.0.s8 %v506
    %v508 = vlaneseq
    %v509 = vshrl.u32 %v508, 7
    %v510 = vsub.s32 %v507, %v509
    %v511 = vrot.slane %v116, %v510
    %v513 = vunpack.c.l.s4 1983009808
    %v514 = vunpack.c.0.s8 %v513
    %v515 = vlaneseq
    %v516 = vshrl.u32 %v515, 7
    %v517 = vsub.s32 %v514, %v516
    %v518 = vrot.slane %v504, %v517
    %v519 = vcombine.low %v496, %v511
    %v520 = vcombine.high %v496, %v511
    %v522 = vunpack.c.l.s4 1934713408
    %v523 = vunpack.c.0.s8 %v522
    %v524 = vlaneseq
    %v525 = vshrl.u32 %v524, 7
    %v526 = vsub.s32 %v523, %v525
    %v527 = vrot.slane %v519, %v526
    %v529 = vunpack.c.l.s4 1934713408
    %v530 = vunpack.c.0.s8 %v529
    %v531 = vlaneseq
    %v532 = vshrl.u32 %v531, 7
    %v533 = vsub.s32 %v530, %v532
    %v534 = vrot.slane %v520, %v533
    %v535 = vcombine.low %v503, %v518
    %v536 = vcombine.high %v503, %v518
    %v538 = vunpack.c.l.s4 1934713408
    %v539 = vunpack.c.0.s8 %v538
    %v540 = vlaneseq
    %v541 = vshrl.u32 %v540, 7
    %v542 = vsub.s32 %v539, %v541
    %v543 = vrot.slane %v535, %v542
    %v545 = vunpack.c.l.s4 1934713408
    %v546 = vunpack.c.0.s8 %v545
    %v547 = vlaneseq
    %v548 = vshrl.u32 %v547, 7
    %v549 = vsub.s32 %v546, %v548
    %v550 = vrot.slane %v536, %v549
    %v551 = vcombine.high %v527, 0.0
    %v552 = vcombine.high %v534, 0.0
    %v553 = vcombine.high %v543, 0.0
    %v554 = vcombine.high %v550, 0.0
    %v555 = vcombine.high %v53, 0.0
    %v557 = vunpack.c.l.s4 1983009808
    %v558 = vunpack.c.0.s8 %v557
    %v559 = vlaneseq
    %v560 = vshrl.u32 %v559, 7
    %v561 = vsub.s32 %v558, %v560
    %v562 = vrot.slane %v53, %v561
    %v564 = vunpack.c.l.s4 1983009808
    %v565 = vunpack.c.0.s8 %v564
    %v566 = vlaneseq
    %v567 = vshrl.u32 %v566, 7
    %v568 = vsub.s32 %v565, %v567
    %v569 = vrot.slane %v555, %v568
    %v570 = vcombine.high %v117, 0.0
    %v572 = vunpack.c.l.s4 1983009808
    %v573 = vunpack.c.0.s8 %v572
    %v574 = vlaneseq
    %v575 = vshrl.u32 %v574, 7
    %v576 = vsub.s32 %v573, %v575
    %v577 = vrot.slane %v117, %v576
    %v579 = vunpack.c.l.s4 1983009808
    %v580 = vunpack.c.0.s8 %v579
    %v581 = vlaneseq
    %v582 = vshrl.u32 %v581, 7
    %v583 = vsub.s32 %v580, %v582
    %v584 = vrot.slane %v570, %v583
    %v585 = vcombine.low %v562, %v577
    %v586 = vcombine.high %v562, %v577
    %v588 = vunpack.c.l.s4 1934713408
    %v589 = vunpack.c.0.s8 %v588
    %v590 = vlaneseq
    %v591 = vshrl.u32 %v590, 7
    %v592 = vsub.s32 %v589, %v591
    %v593 = vrot.slane %v585, %v592
    %v595 = vunpack.c.l.s4 1934713408
    %v596 = vunpack.c.0.s8 %v595
    %v597 = vlaneseq
    %v598 = vshrl.u32 %v597, 7
    %v599 = vsub.s32 %v596, %v598
    %v600 = vrot.slane %v586, %v599
    %v601 = vcombine.low %v569, %v584
    %v602 = vcombine.high %v569, %v584
    %v604 = vunpack.c.l.s4 1934713408
    %v605 = vunpack.c.0.s8 %v604
    %v606 = vlaneseq
    %v607 = vshrl.u32 %v606, 7
    %v608 = vsub.s32 %v605, %v607
    %v609 = vrot.slane %v601, %v608
    %v611 = vunpack.c.l.s4 1934713408
    %v612 = vunpack.c.0.s8 %v611
    %v613 = vlaneseq
    %v614 = vshrl.u32 %v613, 7
    %v615 = vsub.s32 %v612, %v614
    %v616 = vrot.slane %v602, %v615
    %v617 = vcombine.high %v593, 0.0
    %v618 = vcombine.high %v600, 0.0
    %v619 = vcombine.high %v609, 0.0
    %v620 = vcombine.high %v616, 0.0
    %v621 = vcombine.high %v54, 0.0
    %v623 = vunpack.c.l.s4 1983009808
    %v624 = vunpack.c.0.s8 %v623
    %v625 = vlaneseq
    %v626 = vshrl.u32 %v625, 7
    %v627 = vsub.s32 %v624, %v626
    %v628 = vrot.slane %v54, %v627
    %v630 = vunpack.c.l.s4 1983009808
    %v631 = vunpack.c.0.s8 %v630
    %v632 = vlaneseq
    %v633 = vshrl.u32 %v632, 7
    %v634 = vsub.s32 %v631, %v633
    %v635 = vrot.slane %v621, %v634
    %v636 = vcombine.high %v118, 0.0
    %v638 = vunpack.c.l.s4 1983009808
    %v639 = vunpack.c.0.s8 %v638
    %v640 = vlaneseq
    %v641 = vshrl.u32 %v640, 7
    %v642 = vsub.s32 %v639, %v641
    %v643 = vrot.slane %v118, %v642
    %v645 = vunpack.c.l.s4 1983009808
    %v646 = vunpack.c.0.s8 %v645
    %v647 = vlaneseq
    %v648 = vshrl.u32 %v647, 7
    %v649 = vsub.s32 %v646, %v648
    %v650 = vrot.slane %v636, %v649
    %v651 = vcombine.low %v628, %v643
    %v652 = vcombine.high %v628, %v643
    %v654 = vunpack.c.l.s4 1934713408
    %v655 = vunpack.c.0.s8 %v654
    %v656 = vlaneseq
    %v657 = vshrl.u32 %v656, 7
    %v658 = vsub.s32 %v655, %v657
    %v659 = vrot.slane %v651, %v658
    %v661 = vunpack.c.l.s4 1934713408
    %v662 = vunpack.c.0.s8 %v661
    %v663 = vlaneseq
    %v664 = vshrl.u32 %v663, 7
    %v665 = vsub.s32 %v662, %v664
    %v666 = vrot.slane %v652, %v665
    %v667 = vcombine.low %v635, %v650
    %v668 = vcombine.high %v635, %v650
    %v670 = vunpack.c.l.s4 1934713408
    %v671 = vunpack.c.0.s8 %v670
    %v672 = vlaneseq
    %v673 = vshrl.u32 %v672, 7
    %v674 = vsub.s32 %v671, %v673
    %v675 = vrot.slane %v667, %v674
    %v677 = vunpack.c.l.s4 1934713408
    %v678 = vunpack.c.0.s8 %v677
    %v679 = vlaneseq
    %v680 = vshrl.u32 %v679, 7
    %v681 = vsub.s32 %v678, %v680
    %v682 = vrot.slane %v668, %v681
    %v683 = vcombine.high %v659, 0.0
    %v684 = vcombine.high %v666, 0.0
    %v685 = vcombine.high %v675, 0.0
    %v686 = vcombine.high %v682, 0.0
    %v687 = vcombine.high %v55, 0.0
    %v689 = vunpack.c.l.s4 1983009808
    %v690 = vunpack.c.0.s8 %v689
    %v691 = vlaneseq
    %v692 = vshrl.u32 %v691, 7
    %v693 = vsub.s32 %v690, %v692
    %v694 = vrot.slane %v55, %v693
    %v696 = vunpack.c.l.s4 1983009808
    %v697 = vunpack.c.0.s8 %v696
    %v698 = vlaneseq
    %v699 = vshrl.u32 %v698, 7
    %v700 = vsub.s32 %v697, %v699
    %v701 = vrot.slane %v687, %v700
    %v702 = vcombine.high %v119, 0.0
    %v704 = vunpack.c.l.s4 1983009808
    %v705 = vunpack.c.0.s8 %v704
    %v706 = vlaneseq
    %v707 = vshrl.u32 %v706, 7
    %v708 = vsub.s32 %v705, %v707
    %v709 = vrot.slane %v119, %v708
    %v711 = vunpack.c.l.s4 1983009808
    %v712 = vunpack.c.0.s8 %v711
    %v713 = vlaneseq
    %v714 = vshrl.u32 %v713, 7
    %v715 = vsub.s32 %v712, %v714
    %v716 = vrot.slane %v702, %v715
    %v717 = vcombine.low %v694, %v709
    %v718 = vcombine.high %v694, %v709
    %v720 = vunpack.c.l.s4 1934713408
    %v721 = vunpack.c.0.s8 %v720
    %v722 = vlaneseq
    %v723 = vshrl.u32 %v722, 7
    %v724 = vsub.s32 %v721, %v723
    %v725 = vrot.slane %v717, %v724
    %v727 = vunpack.c.l.s4 1934713408
    %v728 = vunpack.c.0.s8 %v727
    %v729 = vlaneseq
    %v730 = vshrl.u32 %v729, 7
    %v731 = vsub.s32 %v728, %v730
    %v732 = vrot.slane %v718, %v731
    %v733 = vcombine.low %v701, %v716
    %v734 = vcombine.high %v701, %v716
    %v736 = vunpack.c.l.s4 1934713408
    %v737 = vunpack.c.0.s8 %v736
    %v738 = vlaneseq
    %v739 = vshrl.u32 %v738, 7
    %v740 = vsub.s32 %v737, %v739
    %v741 = vrot.slane %v733, %v740
    %v743 = vunpack.c.l.s4 1934713408
    %v744 = vunpack.c.0.s8 %v743
    %v745 = vlaneseq
    %v746 = vshrl.u32 %v745, 7
    %v747 = vsub.s32 %v744, %v746
    %v748 = vrot.slane %v734, %v747
    %v749 = vcombine.high %v725, 0.0
    %v750 = vcombine.high %v732, 0.0
    %v751 = vcombine.high %v741, 0.0
    %v752 = vcombine.high %v748, 0.0
    %v753 = vcombine.high %v56, 0.0
    %v755 = vunpack.c.l.s4 1983009808
    %v756 = vunpack.c.0.s8 %v755
    %v757 = vlaneseq
    %v758 = vshrl.u32 %v757, 7
    %v759 = vsub.s32 %v756, %v758
    %v760 = vrot.slane %v56, %v759
    %v762 = vunpack.c.l.s4 1983009808
    %v763 = vunpack.c.0.s8 %v762
    %v764 = vlaneseq
    %v765 = vshrl.u32 %v764, 7
    %v766 = vsub.s32 %v763, %v765
    %v767 = vrot.slane %v753, %v766
    %v768 = vcombine.high %v120, 0.0
    %v770 = vunpack.c.l.s4 1983009808
    %v771 = vunpack.c.0.s8 %v770
    %v772 = vlaneseq
    %v773 = vshrl.u32 %v772, 7
    %v774 = vsub.s32 %v771, %v773
    %v775 = vrot.slane %v120, %v774
    %v777 = vunpack.c.l.s4 1983009808
    %v778 = vunpack.c.0.s8 %v777
    %v779 = vlaneseq
    %v780 = vshrl.u32 %v779, 7
    %v781 = vsub.s32 %v778, %v780
    %v782 = vrot.slane %v768, %v781
    %v783 = vcombine.low %v760, %v775
    %v784 = vcombine.high %v760, %v775
    %v786 = vunpack.c.l.s4 1934713408
    %v787 = vunpack.c.0.s8 %v786
    %v788 = vlaneseq
    %v789 = vshrl.u32 %v788, 7
    %v790 = vsub.s32 %v787, %v789
    %v791 = vrot.slane %v783, %v790
    %v793 = vunpack.c.l.s4 1934713408
    %v794 = vunpack.c.0.s8 %v793
    %v795 = vlaneseq
    %v796 = vshrl.u32 %v795, 7
    %v797 = vsub.s32 %v794, %v796
    %v798 = vrot.slane %v784, %v797
    %v799 = vcombine.low %v767, %v782
    %v800 = vcombine.high %v767, %v782
    %v802 = vunpack.c.l.s4 1934713408
    %v803 = vunpack.c.0.s8 %v802
    %v804 = vlaneseq
    %v805 = vshrl.u32 %v804, 7
    %v806 = vsub.s32 %v803, %v805
    %v807 = vrot.slane %v799, %v806
    %v809 = vunpack.c.l.s4 1934713408
    %v810 = vunpack.c.0.s8 %v809
    %v811 = vlaneseq
    %v812 = vshrl.u32 %v811, 7
    %v813 = vsub.s32 %v810, %v812
    %v814 = vrot.slane %v800, %v813
    %v815 = vcombine.high %v791, 0.0
    %v816 = vcombine.high %v798, 0.0
    %v817 = vcombine.high %v807, 0.0
    %v818 = vcombine.high %v814, 0.0
    %v819 = vcombine.high %v57, 0.0
    %v821 = vunpack.c.l.s4 1983009808
    %v822 = vunpack.c.0.s8 %v821
    %v823 = vlaneseq
    %v824 = vshrl.u32 %v823, 7
    %v825 = vsub.s32 %v822, %v824
    %v826 = vrot.slane %v57, %v825
    %v828 = vunpack.c.l.s4 1983009808
    %v829 = vunpack.c.0.s8 %v828
    %v830 = vlaneseq
    %v831 = vshrl.u32 %v830, 7
    %v832 = vsub.s32 %v829, %v831
    %v833 = vrot.slane %v819, %v832
    %v834 = vcombine.high %v121, 0.0
    %v836 = vunpack.c.l.s4 1983009808
    %v837 = vunpack.c.0.s8 %v836
    %v838 = vlaneseq
    %v839 = vshrl.u32 %v838, 7
    %v840 = vsub.s32 %v837, %v839
    %v841 = vrot.slane %v121, %v840
    %v843 = vunpack.c.l.s4 1983009808
    %v844 = vunpack.c.0.s8 %v843
    %v845 = vlaneseq
    %v846 = vshrl.u32 %v845, 7
    %v847 = vsub.s32 %v844, %v846
    %v848 = vrot.slane %v834, %v847
    %v849 = vcombine.low %v826, %v841
    %v850 = vcombine.high %v826, %v841
    %v852 = vunpack.c.l.s4 1934713408
    %v853 = vunpack.c.0.s8 %v852
    %v854 = vlaneseq
    %v855 = vshrl.u32 %v854, 7
    %v856 = vsub.s32 %v853, %v855
    %v857 = vrot.slane %v849, %v856
    %v859 = vunpack.c.l.s4 1934713408
    %v860 = vunpack.c.0.s8 %v859
    %v861 = vlaneseq
    %v862 = vshrl.u32 %v861, 7
    %v863 = vsub.s32 %v860, %v862
    %v864 = vrot.slane %v850, %v863
    %v865 = vcombine.low %v833, %v848
    %v866 = vcombine.high %v833, %v848
    %v868 = vunpack.c.l.s4 1934713408
    %v869 = vunpack.c.0.s8 %v868
    %v870 = vlaneseq
    %v871 = vshrl.u32 %v870, 7
    %v872 = vsub.s32 %v869, %v871
    %v873 = vrot.slane %v865, %v872
    %v875 = vunpack.c.l.s4 1934713408
    %v876 = vunpack.c.0.s8 %v875
    %v877 = vlaneseq
    %v878 = vshrl.u32 %v877, 7
    %v879 = vsub.s32 %v876, %v878
    %v880 = vrot.slane %v866, %v879
    %v881 = vcombine.high %v857, 0.0
    %v882 = vcombine.high %v864, 0.0
    %v883 = vcombine.high %v873, 0.0
    %v884 = vcombine.high %v880, 0.0
    %v885 = vcombine.high %v58, 0.0
    %v887 = vunpack.c.l.s4 1983009808
    %v888 = vunpack.c.0.s8 %v887
    %v889 = vlaneseq
    %v890 = vshrl.u32 %v889, 7
    %v891 = vsub.s32 %v888, %v890
    %v892 = vrot.slane %v58, %v891
    %v894 = vunpack.c.l.s4 1983009808
    %v895 = vunpack.c.0.s8 %v894
    %v896 = vlaneseq
    %v897 = vshrl.u32 %v896, 7
    %v898 = vsub.s32 %v895, %v897
    %v899 = vrot.slane %v885, %v898
    %v900 = vcombine.high %v122, 0.0
    %v902 = vunpack.c.l.s4 1983009808
    %v903 = vunpack.c.0.s8 %v902
    %v904 = vlaneseq
    %v905 = vshrl.u32 %v904, 7
    %v906 = vsub.s32 %v903, %v905
    %v907 = vrot.slane %v122, %v906
    %v909 = vunpack.c.l.s4 1983009808
    %v910 = vunpack.c.0.s8 %v909
    %v911 = vlaneseq
    %v912 = vshrl.u32 %v911, 7
    %v913 = vsub.s32 %v910, %v912
    %v914 = vrot.slane %v900, %v913
    %v915 = vcombine.low %v892, %v907
    %v916 = vcombine.high %v892, %v907
    %v918 = vunpack.c.l.s4 1934713408
    %v919 = vunpack.c.0.s8 %v918
    %v920 = vlaneseq
    %v921 = vshrl.u32 %v920, 7
    %v922 = vsub.s32 %v919, %v921
    %v923 = vrot.slane %v915, %v922
    %v925 = vunpack.c.l.s4 1934713408
    %v926 = vunpack.c.0.s8 %v925
    %v927 = vlaneseq
    %v928 = vshrl.u32 %v927, 7
    %v929 = vsub.s32 %v926, %v928
    %v930 = vrot.slane %v916, %v929
    %v931 = vcombine.low %v899, %v914
    %v932 = vcombine.high %v899, %v914
    %v934 = vunpack.c.l.s4 1934713408
    %v935 = vunpack.c.0.s8 %v934
    %v936 = vlaneseq
    %v937 = vshrl.u32 %v936, 7
    %v938 = vsub.s32 %v935, %v937
    %v939 = vrot.slane %v931, %v938
    %v941 = vunpack.c.l.s4 1934713408
    %v942 = vunpack.c.0.s8 %v941
    %v943 = vlaneseq
    %v944 = vshrl.u32 %v943, 7
    %v945 = vsub.s32 %v942, %v944
    %v946 = vrot.slane %v932, %v945
    %v947 = vcombine.high %v923, 0.0
    %v948 = vcombine.high %v930, 0.0
    %v949 = vcombine.high %v939, 0.0
    %v950 = vcombine.high %v946, 0.0
    %v951 = vcombine.high %v59, 0.0
    %v953 = vunpack.c.l.s4 1983009808
    %v954 = vunpack.c.0.s8 %v953
    %v955 = vlaneseq
    %v956 = vshrl.u32 %v955, 7
    %v957 = vsub.s32 %v954, %v956
    %v958 = vrot.slane %v59, %v957
    %v960 = vunpack.c.l.s4 1983009808
    %v961 = vunpack.c.0.s8 %v960
    %v962 = vlaneseq
    %v963 = vshrl.u32 %v962, 7
    %v964 = vsub.s32 %v961, %v963
    %v965 = vrot.slane %v951, %v964
    %v966 = vcombine.high %v123, 0.0
    %v968 = vunpack.c.l.s4 1983009808
    %v969 = vunpack.c.0.s8 %v968
    %v970 = vlaneseq
    %v971 = vshrl.u32 %v970, 7
    %v972 = vsub.s32 %v969, %v971
    %v973 = vrot.slane %v123, %v972
    %v975 = vunpack.c.l.s4 1983009808
    %v976 = vunpack.c.0.s8 %v975
    %v977 = vlaneseq
    %v978 = vshrl.u32 %v977, 7
    %v979 = vsub.s32 %v976, %v978
    %v980 = vrot.slane %v966, %v979
    %v981 = vcombine.low %v958, %v973
    %v982 = vcombine.high %v958, %v973
    %v984 = vunpack.c.l.s4 1934713408
    %v985 = vunpack.c.0.s8 %v984
    %v986 = vlaneseq
    %v987 = vshrl.u32 %v986, 7
    %v988 = vsub.s32 %v985, %v987
    %v989 = vrot.slane %v981, %v988
    %v991 = vunpack.c.l.s4 1934713408
    %v992 = vunpack.c.0.s8 %v991
    %v993 = vlaneseq
    %v994 = vshrl.u32 %v993, 7
    %v995 = vsub.s32 %v992, %v994
    %v996 = vrot.slane %v982, %v995
    %v997 = vcombine.low %v965, %v980
    %v998 = vcombine.high %v965, %v980
    %v1000 = vunpack.c.l.s4 1934713408
    %v1001 = vunpack.c.0.s8 %v1000
    %v1002 = vlaneseq
    %v1003 = vshrl.u32 %v1002, 7
    %v1004 = vsub.s32 %v1001, %v1003
    %v1005 = vrot.slane %v997, %v1004
    %v1007 = vunpack.c.l.s4 1934713408
    %v1008 = vunpack.c.0.s8 %v1007
    %v1009 = vlaneseq
    %v1010 = vshrl.u32 %v1009, 7
    %v1011 = vsub.s32 %v1008, %v1010
    %v1012 = vrot.slane %v998, %v1011
    %v1013 = vcombine.high %v989, 0.0
    %v1014 = vcombine.high %v996, 0.0
    %v1015 = vcombine.high %v1005, 0.0
    %v1016 = vcombine.high %v1012, 0.0
    %v1017 = vcombine.high %v60, 0.0
    %v1019 = vunpack.c.l.s4 1983009808
    %v1020 = vunpack.c.0.s8 %v1019
    %v1021 = vlaneseq
    %v1022 = vshrl.u32 %v1021, 7
    %v1023 = vsub.s32 %v1020, %v1022
    %v1024 = vrot.slane %v60, %v1023
    %v1026 = vunpack.c.l.s4 1983009808
    %v1027 = vunpack.c.0.s8 %v1026
    %v1028 = vlaneseq
    %v1029 = vshrl.u32 %v1028, 7
    %v1030 = vsub.s32 %v1027, %v1029
    %v1031 = vrot.slane %v1017, %v1030
    %v1032 = vcombine.high %v124, 0.0
    %v1034 = vunpack.c.l.s4 1983009808
    %v1035 = vunpack.c.0.s8 %v1034
    %v1036 = vlaneseq
    %v1037 = vshrl.u32 %v1036, 7
    %v1038 = vsub.s32 %v1035, %v1037
    %v1039 = vrot.slane %v124, %v1038
    %v1041 = vunpack.c.l.s4 1983009808
    %v1042 = vunpack.c.0.s8 %v1041
    %v1043 = vlaneseq
    %v1044 = vshrl.u32 %v1043, 7
    %v1045 = vsub.s32 %v1042, %v1044
    %v1046 = vrot.slane %v1032, %v1045
    %v1047 = vcombine.low %v1024, %v1039
    %v1048 = vcombine.high %v1024, %v1039
    %v1050 = vunpack.c.l.s4 1934713408
    %v1051 = vunpack.c.0.s8 %v1050
    %v1052 = vlaneseq
    %v1053 = vshrl.u32 %v1052, 7
    %v1054 = vsub.s32 %v1051, %v1053
    %v1055 = vrot.slane %v1047, %v1054
    %v1057 = vunpack.c.l.s4 1934713408
    %v1058 = vunpack.c.0.s8 %v1057
    %v1059 = vlaneseq
    %v1060 = vshrl.u32 %v1059, 7
    %v1061 = vsub.s32 %v1058, %v1060
    %v1062 = vrot.slane %v1048, %v1061
    %v1063 = vcombine.low %v1031, %v1046
    %v1064 = vcombine.high %v1031, %v1046
    %v1066 = vunpack.c.l.s4 1934713408
    %v1067 = vunpack.c.0.s8 %v1066
    %v1068 = vlaneseq
    %v1069 = vshrl.u32 %v1068, 7
    %v1070 = vsub.s32 %v1067, %v1069
    %v1071 = vrot.slane %v1063, %v1070
    %v1073 = vunpack.c.l.s4 1934713408
    %v1074 = vunpack.c.0.s8 %v1073
    %v1075 = vlaneseq
    %v1076 = vshrl.u32 %v1075, 7
    %v1077 = vsub.s32 %v1074, %v1076
    %v1078 = vrot.slane %v1064, %v1077
    %v1079 = vcombine.high %v1055, 0.0
    %v1080 = vcombine.high %v1062, 0.0
    %v1081 = vcombine.high %v1071, 0.0
    %v1082 = vcombine.high %v1078, 0.0
    %v1083 = vcombine.high %v61, 0.0
    %v1085 = vunpack.c.l.s4 1983009808
    %v1086 = vunpack.c.0.s8 %v1085
    %v1087 = vlaneseq
    %v1088 = vshrl.u32 %v1087, 7
    %v1089 = vsub.s32 %v1086, %v1088
    %v1090 = vrot.slane %v61, %v1089
    %v1092 = vunpack.c.l.s4 1983009808
    %v1093 = vunpack.c.0.s8 %v1092
    %v1094 = vlaneseq
    %v1095 = vshrl.u32 %v1094, 7
    %v1096 = vsub.s32 %v1093, %v1095
    %v1097 = vrot.slane %v1083, %v1096
    %v1098 = vcombine.high %v125, 0.0
    %v1100 = vunpack.c.l.s4 1983009808
    %v1101 = vunpack.c.0.s8 %v1100
    %v1102 = vlaneseq
    %v1103 = vshrl.u32 %v1102, 7
    %v1104 = vsub.s32 %v1101, %v1103
    %v1105 = vrot.slane %v125, %v1104
    %v1107 = vunpack.c.l.s4 1983009808
    %v1108 = vunpack.c.0.s8 %v1107
    %v1109 = vlaneseq
    %v1110 = vshrl.u32 %v1109, 7
    %v1111 = vsub.s32 %v1108, %v1110
    %v1112 = vrot.slane %v1098, %v1111
    %v1113 = vcombine.low %v1090, %v1105
    %v1114 = vcombine.high %v1090, %v1105
    %v1116 = vunpack.c.l.s4 1934713408
    %v1117 = vunpack.c.0.s8 %v1116
    %v1118 = vlaneseq
    %v1119 = vshrl.u32 %v1118, 7
    %v1120 = vsub.s32 %v1117, %v1119
    %v1121 = vrot.slane %v1113, %v1120
    %v1123 = vunpack.c.l.s4 1934713408
    %v1124 = vunpack.c.0.s8 %v1123
    %v1125 = vlaneseq
    %v1126 = vshrl.u32 %v1125, 7
    %v1127 = vsub.s32 %v1124, %v1126
    %v1128 = vrot.slane %v1114, %v1127
    %v1129 = vcombine.low %v1097, %v1112
    %v1130 = vcombine.high %v1097, %v1112
    %v1132 = vunpack.c.l.s4 1934713408
    %v1133 = vunpack.c.0.s8 %v1132
    %v1134 = vlaneseq
    %v1135 = vshrl.u32 %v1134, 7
    %v1136 = vsub.s32 %v1133, %v1135
    %v1137 = vrot.slane %v1129, %v1136
    %v1139 = vunpack.c.l.s4 1934713408
    %v1140 = vunpack.c.0.s8 %v1139
    %v1141 = vlaneseq
    %v1142 = vshrl.u32 %v1141, 7
    %v1143 = vsub.s32 %v1140, %v1142
    %v1144 = vrot.slane %v1130, %v1143
    %v1145 = vcombine.high %v1121, 0.0
    %v1146 = vcombine.high %v1128, 0.0
    %v1147 = vcombine.high %v1137, 0.0
    %v1148 = vcombine.high %v1144, 0.0
    %v1149 = vcombine.high %v62, 0.0
    %v1151 = vunpack.c.l.s4 1983009808
    %v1152 = vunpack.c.0.s8 %v1151
    %v1153 = vlaneseq
    %v1154 = vshrl.u32 %v1153, 7
    %v1155 = vsub.s32 %v1152, %v1154
    %v1156 = vrot.slane %v62, %v1155
    %v1158 = vunpack.c.l.s4 1983009808
    %v1159 = vunpack.c.0.s8 %v1158
    %v1160 = vlaneseq
    %v1161 = vshrl.u32 %v1160, 7
    %v1162 = vsub.s32 %v1159, %v1161
    %v1163 = vrot.slane %v1149, %v1162
    %v1164 = vcombine.high %v126, 0.0
    %v1166 = vunpack.c.l.s4 1983009808
    %v1167 = vunpack.c.0.s8 %v1166
    %v1168 = vlaneseq
    %v1169 = vshrl.u32 %v1168, 7
    %v1170 = vsub.s32 %v1167, %v1169
    %v1171 = vrot.slane %v126, %v1170
    %v1173 = vunpack.c.l.s4 1983009808
    %v1174 = vunpack.c.0.s8 %v1173
    %v1175 = vlaneseq
    %v1176 = vshrl.u32 %v1175, 7
    %v1177 = vsub.s32 %v1174, %v1176
    %v1178 = vrot.slane %v1164, %v1177
    %v1179 = vcombine.low %v1156, %v1171
    %v1180 = vcombine.high %v1156, %v1171
    %v1182 = vunpack.c.l.s4 1934713408
    %v1183 = vunpack.c.0.s8 %v1182
    %v1184 = vlaneseq
    %v1185 = vshrl.u32 %v1184, 7
    %v1186 = vsub.s32 %v1183, %v1185
    %v1187 = vrot.slane %v1179, %v1186
    %v1189 = vunpack.c.l.s4 1934713408
    %v1190 = vunpack.c.0.s8 %v1189
    %v1191 = vlaneseq
    %v1192 = vshrl.u32 %v1191, 7
    %v1193 = vsub.s32 %v1190, %v1192
    %v1194 = vrot.slane %v1180, %v1193
    %v1195 = vcombine.low %v1163, %v1178
    %v1196 = vcombine.high %v1163, %v1178
    %v1198 = vunpack.c.l.s4 1934713408
    %v1199 = vunpack.c.0.s8 %v1198
    %v1200 = vlaneseq
    %v1201 = vshrl.u32 %v1200, 7
    %v1202 = vsub.s32 %v1199, %v1201
    %v1203 = vrot.slane %v1195, %v1202
    %v1205 = vunpack.c.l.s4 1934713408
    %v1206 = vunpack.c.0.s8 %v1205
    %v1207 = vlaneseq
    %v1208 = vshrl.u32 %v1207, 7
    %v1209 = vsub.s32 %v1206, %v1208
    %v1210 = vrot.slane %v1196, %v1209
    %v1211 = vcombine.high %v1187, 0.0
    %v1212 = vcombine.high %v1194, 0.0
    %v1213 = vcombine.high %v1203, 0.0
    %v1214 = vcombine.high %v1210, 0.0
    %v1215 = vcombine.high %v79, 0.0
    %v1217 = vunpack.c.l.s4 1983009808
    %v1218 = vunpack.c.0.s8 %v1217
    %v1219 = vlaneseq
    %v1220 = vshrl.u32 %v1219, 7
    %v1221 = vsub.s32 %v1218, %v1220
    %v1222 = vrot.slane %v79, %v1221
    %v1224 = vunpack.c.l.s4 1983009808
    %v1225 = vunpack.c.0.s8 %v1224
    %v1226 = vlaneseq
    %v1227 = vshrl.u32 %v1226, 7
    %v1228 = vsub.s32 %v1225, %v1227
    %v1229 = vrot.slane %v1215, %v1228
    %v1230 = vcombine.high %v143, 0.0
    %v1232 = vunpack.c.l.s4 1983009808
    %v1233 = vunpack.c.0.s8 %v1232
    %v1234 = vlaneseq
    %v1235 = vshrl.u32 %v1234, 7
    %v1236 = vsub.s32 %v1233, %v1235
    %v1237 = vrot.slane %v143, %v1236
    %v1239 = vunpack.c.l.s4 1983009808
    %v1240 = vunpack.c.0.s8 %v1239
    %v1241 = vlaneseq
    %v1242 = vshrl.u32 %v1241, 7
    %v1243 = vsub.s32 %v1240, %v1242
    %v1244 = vrot.slane %v1230, %v1243
    %v1245 = vcombine.low %v1222, %v1237
    %v1246 = vcombine.high %v1222, %v1237
    %v1248 = vunpack.c.l.s4 1934713408
    %v1249 = vunpack.c.0.s8 %v1248
    %v1250 = vlaneseq
    %v1251 = vshrl.u32 %v1250, 7
    %v1252 = vsub.s32 %v1249, %v1251
    %v1253 = vrot.slane %v1245, %v1252
    %v1255 = vunpack.c.l.s4 1934713408
    %v1256 = vunpack.c.0.s8 %v1255
    %v1257 = vlaneseq
    %v1258 = vshrl.u32 %v1257, 7
    %v1259 = vsub.s32 %v1256, %v1258
    %v1260 = vrot.slane %v1246, %v1259
    %v1261 = vcombine.low %v1229, %v1244
    %v1262 = vcombine.high %v1229, %v1244
    %v1264 = vunpack.c.l.s4 1934713408
    %v1265 = vunpack.c.0.s8 %v1264
    %v1266 = vlaneseq
    %v1267 = vshrl.u32 %v1266, 7
    %v1268 = vsub.s32 %v1265, %v1267
    %v1269 = vrot.slane %v1261, %v1268
    %v1271 = vunpack.c.l.s4 1934713408
    %v1272 = vunpack.c.0.s8 %v1271
    %v1273 = vlaneseq
    %v1274 = vshrl.u32 %v1273, 7
    %v1275 = vsub.s32 %v1272, %v1274
    %v1276 = vrot.slane %v1262, %v1275
    %v1277 = vcombine.high %v1253, 0.0
    %v1278 = vcombine.high %v1260, 0.0
    %v1279 = vcombine.high %v1269, 0.0
    %v1280 = vcombine.high %v1276, 0.0
    %v1281 = vcombine.high %v80, 0.0
    %v1283 = vunpack.c.l.s4 1983009808
    %v1284 = vunpack.c.0.s8 %v1283
    %v1285 = vlaneseq
    %v1286 = vshrl.u32 %v1285, 7
    %v1287 = vsub.s32 %v1284, %v1286
    %v1288 = vrot.slane %v80, %v1287
    %v1290 = vunpack.c.l.s4 1983009808
    %v1291 = vunpack.c.0.s8 %v1290
    %v1292 = vlaneseq
    %v1293 = vshrl.u32 %v1292, 7
    %v1294 = vsub.s32 %v1291, %v1293
    %v1295 = vrot.slane %v1281, %v1294
    %v1296 = vcombine.high %v144, 0.0
    %v1298 = vunpack.c.l.s4 1983009808
    %v1299 = vunpack.c.0.s8 %v1298
    %v1300 = vlaneseq
    %v1301 = vshrl.u32 %v1300, 7
    %v1302 = vsub.s32 %v1299, %v1301
    %v1303 = vrot.slane %v144, %v1302
    %v1305 = vunpack.c.l.s4 1983009808
    %v1306 = vunpack.c.0.s8 %v1305
    %v1307 = vlaneseq
    %v1308 = vshrl.u32 %v1307, 7
    %v1309 = vsub.s32 %v1306, %v1308
    %v1310 = vrot.slane %v1296, %v1309
    %v1311 = vcombine.low %v1288, %v1303
    %v1312 = vcombine.high %v1288, %v1303
    %v1314 = vunpack.c.l.s4 1934713408
    %v1315 = vunpack.c.0.s8 %v1314
    %v1316 = vlaneseq
    %v1317 = vshrl.u32 %v1316, 7
    %v1318 = vsub.s32 %v1315, %v1317
    %v1319 = vrot.slane %v1311, %v1318
    %v1321 = vunpack.c.l.s4 1934713408
    %v1322 = vunpack.c.0.s8 %v1321
    %v1323 = vlaneseq
    %v1324 = vshrl.u32 %v1323, 7
    %v1325 = vsub.s32 %v1322, %v1324
    %v1326 = vrot.slane %v1312, %v1325
    %v1327 = vcombine.low %v1295, %v1310
    %v1328 = vcombine.high %v1295, %v1310
    %v1330 = vunpack.c.l.s4 1934713408
    %v1331 = vunpack.c.0.s8 %v1330
    %v1332 = vlaneseq
    %v1333 = vshrl.u32 %v1332, 7
    %v1334 = vsub.s32 %v1331, %v1333
    %v1335 = vrot.slane %v1327, %v1334
    %v1337 = vunpack.c.l.s4 1934713408
    %v1338 = vunpack.c.0.s8 %v1337
    %v1339 = vlaneseq
    %v1340 = vshrl.u32 %v1339, 7
    %v1341 = vsub.s32 %v1338, %v1340
    %v1342 = vrot.slane %v1328, %v1341
    %v1343 = vcombine.high %v1319, 0.0
    %v1344 = vcombine.high %v1326, 0.0
    %v1345 = vcombine.high %v1335, 0.0
    %v1346 = vcombine.high %v1342, 0.0
    %v1347 = vcombine.high %v81, 0.0
    %v1349 = vunpack.c.l.s4 1983009808
    %v1350 = vunpack.c.0.s8 %v1349
    %v1351 = vlaneseq
    %v1352 = vshrl.u32 %v1351, 7
    %v1353 = vsub.s32 %v1350, %v1352
    %v1354 = vrot.slane %v81, %v1353
    %v1356 = vunpack.c.l.s4 1983009808
    %v1357 = vunpack.c.0.s8 %v1356
    %v1358 = vlaneseq
    %v1359 = vshrl.u32 %v1358, 7
    %v1360 = vsub.s32 %v1357, %v1359
    %v1361 = vrot.slane %v1347, %v1360
    %v1362 = vcombine.high %v145, 0.0
    %v1364 = vunpack.c.l.s4 1983009808
    %v1365 = vunpack.c.0.s8 %v1364
    %v1366 = vlaneseq
    %v1367 = vshrl.u32 %v1366, 7
    %v1368 = vsub.s32 %v1365, %v1367
    %v1369 = vrot.slane %v145, %v1368
    %v1371 = vunpack.c.l.s4 1983009808
    %v1372 = vunpack.c.0.s8 %v1371
    %v1373 = vlaneseq
    %v1374 = vshrl.u32 %v1373, 7
    %v1375 = vsub.s32 %v1372, %v1374
    %v1376 = vrot.slane %v1362, %v1375
    %v1377 = vcombine.low %v1354, %v1369
    %v1378 = vcombine.high %v1354, %v1369
    %v1380 = vunpack.c.l.s4 1934713408
    %v1381 = vunpack.c.0.s8 %v1380
    %v1382 = vlaneseq
    %v1383 = vshrl.u32 %v1382, 7
    %v1384 = vsub.s32 %v1381, %v1383
    %v1385 = vrot.slane %v1377, %v1384
    %v1387 = vunpack.c.l.s4 1934713408
    %v1388 = vunpack.c.0.s8 %v1387
    %v1389 = vlaneseq
    %v1390 = vshrl.u32 %v1389, 7
    %v1391 = vsub.s32 %v1388, %v1390
    %v1392 = vrot.slane %v1378, %v1391
    %v1393 = vcombine.low %v1361, %v1376
    %v1394 = vcombine.high %v1361, %v1376
    %v1396 = vunpack.c.l.s4 1934713408
    %v1397 = vunpack.c.0.s8 %v1396
    %v1398 = vlaneseq
    %v1399 = vshrl.u32 %v1398, 7
    %v1400 = vsub.s32 %v1397, %v1399
    %v1401 = vrot.slane %v1393, %v1400
    %v1403 = vunpack.c.l.s4 1934713408
    %v1404 = vunpack.c.0.s8 %v1403
    %v1405 = vlaneseq
    %v1406 = vshrl.u32 %v1405, 7
    %v1407 = vsub.s32 %v1404, %v1406
    %v1408 = vrot.slane %v1394, %v1407
    %v1409 = vcombine.high %v1385, 0.0
    %v1410 = vcombine.high %v1392, 0.0
    %v1411 = vcombine.high %v1401, 0.0
    %v1412 = vcombine.high %v1408, 0.0
    %v1413 = vcombine.high %v82, 0.0
    %v1415 = vunpack.c.l.s4 1983009808
    %v1416 = vunpack.c.0.s8 %v1415
    %v1417 = vlaneseq
    %v1418 = vshrl.u32 %v1417, 7
    %v1419 = vsub.s32 %v1416, %v1418
    %v1420 = vrot.slane %v82, %v1419
    %v1422 = vunpack.c.l.s4 1983009808
    %v1423 = vunpack.c.0.s8 %v1422
    %v1424 = vlaneseq
    %v1425 = vshrl.u32 %v1424, 7
    %v1426 = vsub.s32 %v1423, %v1425
    %v1427 = vrot.slane %v1413, %v1426
    %v1428 = vcombine.high %v146, 0.0
    %v1430 = vunpack.c.l.s4 1983009808
    %v1431 = vunpack.c.0.s8 %v1430
    %v1432 = vlaneseq
    %v1433 = vshrl.u32 %v1432, 7
    %v1434 = vsub.s32 %v1431, %v1433
    %v1435 = vrot.slane %v146, %v1434
    %v1437 = vunpack.c.l.s4 1983009808
    %v1438 = vunpack.c.0.s8 %v1437
    %v1439 = vlaneseq
    %v1440 = vshrl.u32 %v1439, 7
    %v1441 = vsub.s32 %v1438, %v1440
    %v1442 = vrot.slane %v1428, %v1441
    %v1443 = vcombine.low %v1420, %v1435
    %v1444 = vcombine.high %v1420, %v1435
    %v1446 = vunpack.c.l.s4 1934713408
    %v1447 = vunpack.c.0.s8 %v1446
    %v1448 = vlaneseq
    %v1449 = vshrl.u32 %v1448, 7
    %v1450 = vsub.s32 %v1447, %v1449
    %v1451 = vrot.slane %v1443, %v1450
    %v1453 = vunpack.c.l.s4 1934713408
    %v1454 = vunpack.c.0.s8 %v1453
    %v1455 = vlaneseq
    %v1456 = vshrl.u32 %v1455, 7
    %v1457 = vsub.s32 %v1454, %v1456
    %v1458 = vrot.slane %v1444, %v1457
    %v1459 = vcombine.low %v1427, %v1442
    %v1460 = vcombine.high %v1427, %v1442
    %v1462 = vunpack.c.l.s4 1934713408
    %v1463 = vunpack.c.0.s8 %v1462
    %v1464 = vlaneseq
    %v1465 = vshrl.u32 %v1464, 7
    %v1466 = vsub.s32 %v1463, %v1465
    %v1467 = vrot.slane %v1459, %v1466
    %v1469 = vunpack.c.l.s4 1934713408
    %v1470 = vunpack.c.0.s8 %v1469
    %v1471 = vlaneseq
    %v1472 = vshrl.u32 %v1471, 7
    %v1473 = vsub.s32 %v1470, %v1472
    %v1474 = vrot.slane %v1460, %v1473
    %v1475 = vcombine.high %v1451, 0.0
    %v1476 = vcombine.high %v1458, 0.0
    %v1477 = vcombine.high %v1467, 0.0
    %v1478 = vcombine.high %v1474, 0.0
    %v1479 = vcombine.high %v83, 0.0
    %v1481 = vunpack.c.l.s4 1983009808
    %v1482 = vunpack.c.0.s8 %v1481
    %v1483 = vlaneseq
    %v1484 = vshrl.u32 %v1483, 7
    %v1485 = vsub.s32 %v1482, %v1484
    %v1486 = vrot.slane %v83, %v1485
    %v1488 = vunpack.c.l.s4 1983009808
    %v1489 = vunpack.c.0.s8 %v1488
    %v1490 = vlaneseq
    %v1491 = vshrl.u32 %v1490, 7
    %v1492 = vsub.s32 %v1489, %v1491
    %v1493 = vrot.slane %v1479, %v1492
    %v1494 = vcombine.high %v147, 0.0
    %v1496 = vunpack.c.l.s4 1983009808
    %v1497 = vunpack.c.0.s8 %v1496
    %v1498 = vlaneseq
    %v1499 = vshrl.u32 %v1498, 7
    %v1500 = vsub.s32 %v1497, %v1499
    %v1501 = vrot.slane %v147, %v1500
    %v1503 = vunpack.c.l.s4 1983009808
    %v1504 = vunpack.c.0.s8 %v1503
    %v1505 = vlaneseq
    %v1506 = vshrl.u32 %v1505, 7
    %v1507 = vsub.s32 %v1504, %v1506
    %v1508 = vrot.slane %v1494, %v1507
    %v1509 = vcombine.low %v1486, %v1501
    %v1510 = vcombine.high %v1486, %v1501
    %v1512 = vunpack.c.l.s4 1934713408
    %v1513 = vunpack.c.0.s8 %v1512
    %v1514 = vlaneseq
    %v1515 = vshrl.u32 %v1514, 7
    %v1516 = vsub.s32 %v1513, %v1515
    %v1517 = vrot.slane %v1509, %v1516
    %v1519 = vunpack.c.l.s4 1934713408
    %v1520 = vunpack.c.0.s8 %v1519
    %v1521 = vlaneseq
    %v1522 = vshrl.u32 %v1521, 7
    %v1523 = vsub.s32 %v1520, %v1522
    %v1524 = vrot.slane %v1510, %v1523
    %v1525 = vcombine.low %v1493, %v1508
    %v1526 = vcombine.high %v1493, %v1508
    %v1528 = vunpack.c.l.s4 1934713408
    %v1529 = vunpack.c.0.s8 %v1528
    %v1530 = vlaneseq
    %v1531 = vshrl.u32 %v1530, 7
    %v1532 = vsub.s32 %v1529, %v1531
    %v1533 = vrot.slane %v1525, %v1532
    %v1535 = vunpack.c.l.s4 1934713408
    %v1536 = vunpack.c.0.s8 %v1535
    %v1537 = vlaneseq
    %v1538 = vshrl.u32 %v1537, 7
    %v1539 = vsub.s32 %v1536, %v1538
    %v1540 = vrot.slane %v1526, %v1539
    %v1541 = vcombine.high %v1517, 0.0
    %v1542 = vcombine.high %v1524, 0.0
    %v1543 = vcombine.high %v1533, 0.0
    %v1544 = vcombine.high %v1540, 0.0
    %v1545 = vcombine.high %v84, 0.0
    %v1547 = vunpack.c.l.s4 1983009808
    %v1548 = vunpack.c.0.s8 %v1547
    %v1549 = vlaneseq
    %v1550 = vshrl.u32 %v1549, 7
    %v1551 = vsub.s32 %v1548, %v1550
    %v1552 = vrot.slane %v84, %v1551
    %v1554 = vunpack.c.l.s4 1983009808
    %v1555 = vunpack.c.0.s8 %v1554
    %v1556 = vlaneseq
    %v1557 = vshrl.u32 %v1556, 7
    %v1558 = vsub.s32 %v1555, %v1557
    %v1559 = vrot.slane %v1545, %v1558
    %v1560 = vcombine.high %v148, 0.0
    %v1562 = vunpack.c.l.s4 1983009808
    %v1563 = vunpack.c.0.s8 %v1562
    %v1564 = vlaneseq
    %v1565 = vshrl.u32 %v1564, 7
    %v1566 = vsub.s32 %v1563, %v1565
    %v1567 = vrot.slane %v148, %v1566
    %v1569 = vunpack.c.l.s4 1983009808
    %v1570 = vunpack.c.0.s8 %v1569
    %v1571 = vlaneseq
    %v1572 = vshrl.u32 %v1571, 7
    %v1573 = vsub.s32 %v1570, %v1572
    %v1574 = vrot.slane %v1560, %v1573
    %v1575 = vcombine.low %v1552, %v1567
    %v1576 = vcombine.high %v1552, %v1567
    %v1578 = vunpack.c.l.s4 1934713408
    %v1579 = vunpack.c.0.s8 %v1578
    %v1580 = vlaneseq
    %v1581 = vshrl.u32 %v1580, 7
    %v1582 = vsub.s32 %v1579, %v1581
    %v1583 = vrot.slane %v1575, %v1582
    %v1585 = vunpack.c.l.s4 1934713408
    %v1586 = vunpack.c.0.s8 %v1585
    %v1587 = vlaneseq
    %v1588 = vshrl.u32 %v1587, 7
    %v1589 = vsub.s32 %v1586, %v1588
    %v1590 = vrot.slane %v1576, %v1589
    %v1591 = vcombine.low %v1559, %v1574
    %v1592 = vcombine.high %v1559, %v1574
    %v1594 = vunpack.c.l.s4 1934713408
    %v1595 = vunpack.c.0.s8 %v1594
    %v1596 = vlaneseq
    %v1597 = vshrl.u32 %v1596, 7
    %v1598 = vsub.s32 %v1595, %v1597
    %v1599 = vrot.slane %v1591, %v1598
    %v1601 = vunpack.c.l.s4 1934713408
    %v1602 = vunpack.c.0.s8 %v1601
    %v1603 = vlaneseq
    %v1604 = vshrl.u32 %v1603, 7
    %v1605 = vsub.s32 %v1602, %v1604
    %v1606 = vrot.slane %v1592, %v1605
    %v1607 = vcombine.high %v1583, 0.0
    %v1608 = vcombine.high %v1590, 0.0
    %v1609 = vcombine.high %v1599, 0.0
    %v1610 = vcombine.high %v1606, 0.0
    %v1611 = vcombine.high %v85, 0.0
    %v1613 = vunpack.c.l.s4 1983009808
    %v1614 = vunpack.c.0.s8 %v1613
    %v1615 = vlaneseq
    %v1616 = vshrl.u32 %v1615, 7
    %v1617 = vsub.s32 %v1614, %v1616
    %v1618 = vrot.slane %v85, %v1617
    %v1620 = vunpack.c.l.s4 1983009808
    %v1621 = vunpack.c.0.s8 %v1620
    %v1622 = vlaneseq
    %v1623 = vshrl.u32 %v1622, 7
    %v1624 = vsub.s32 %v1621, %v1623
    %v1625 = vrot.slane %v1611, %v1624
    %v1626 = vcombine.high %v149, 0.0
    %v1628 = vunpack.c.l.s4 1983009808
    %v1629 = vunpack.c.0.s8 %v1628
    %v1630 = vlaneseq
    %v1631 = vshrl.u32 %v1630, 7
    %v1632 = vsub.s32 %v1629, %v1631
    %v1633 = vrot.slane %v149, %v1632
    %v1635 = vunpack.c.l.s4 1983009808
    %v1636 = vunpack.c.0.s8 %v1635
    %v1637 = vlaneseq
    %v1638 = vshrl.u32 %v1637, 7
    %v1639 = vsub.s32 %v1636, %v1638
    %v1640 = vrot.slane %v1626, %v1639
    %v1641 = vcombine.low %v1618, %v1633
    %v1642 = vcombine.high %v1618, %v1633
    %v1644 = vunpack.c.l.s4 1934713408
    %v1645 = vunpack.c.0.s8 %v1644
    %v1646 = vlaneseq
    %v1647 = vshrl.u32 %v1646, 7
    %v1648 = vsub.s32 %v1645, %v1647
    %v1649 = vrot.slane %v1641, %v1648
    %v1651 = vunpack.c.l.s4 1934713408
    %v1652 = vunpack.c.0.s8 %v1651
    %v1653 = vlaneseq
    %v1654 = vshrl.u32 %v1653, 7
    %v1655 = vsub.s32 %v1652, %v1654
    %v1656 = vrot.slane %v1642, %v1655
    %v1657 = vcombine.low %v1625, %v1640
    %v1658 = vcombine.high %v1625, %v1640
    %v1660 = vunpack.c.l.s4 1934713408
    %v1661 = vunpack.c.0.s8 %v1660
    %v1662 = vlaneseq
    %v1663 = vshrl.u32 %v1662, 7
    %v1664 = vsub.s32 %v1661, %v1663
    %v1665 = vrot.slane %v1657, %v1664
    %v1667 = vunpack.c.l.s4 1934713408
    %v1668 = vunpack.c.0.s8 %v1667
    %v1669 = vlaneseq
    %v1670 = vshrl.u32 %v1669, 7
    %v1671 = vsub.s32 %v1668, %v1670
    %v1672 = vrot.slane %v1658, %v1671
    %v1673 = vcombine.high %v1649, 0.0
    %v1674 = vcombine.high %v1656, 0.0
    %v1675 = vcombine.high %v1665, 0.0
    %v1676 = vcombine.high %v1672, 0.0
    %v1677 = vcombine.high %v86, 0.0
    %v1679 = vunpack.c.l.s4 1983009808
    %v1680 = vunpack.c.0.s8 %v1679
    %v1681 = vlaneseq
    %v1682 = vshrl.u32 %v1681, 7
    %v1683 = vsub.s32 %v1680, %v1682
    %v1684 = vrot.slane %v86, %v1683
    %v1686 = vunpack.c.l.s4 1983009808
    %v1687 = vunpack.c.0.s8 %v1686
    %v1688 = vlaneseq
    %v1689 = vshrl.u32 %v1688, 7
    %v1690 = vsub.s32 %v1687, %v1689
    %v1691 = vrot.slane %v1677, %v1690
    %v1692 = vcombine.high %v150, 0.0
    %v1694 = vunpack.c.l.s4 1983009808
    %v1695 = vunpack.c.0.s8 %v1694
    %v1696 = vlaneseq
    %v1697 = vshrl.u32 %v1696, 7
    %v1698 = vsub.s32 %v1695, %v1697
    %v1699 = vrot.slane %v150, %v1698
    %v1701 = vunpack.c.l.s4 1983009808
    %v1702 = vunpack.c.0.s8 %v1701
    %v1703 = vlaneseq
    %v1704 = vshrl.u32 %v1703, 7
    %v1705 = vsub.s32 %v1702, %v1704
    %v1706 = vrot.slane %v1692, %v1705
    %v1707 = vcombine.low %v1684, %v1699
    %v1708 = vcombine.high %v1684, %v1699
    %v1710 = vunpack.c.l.s4 1934713408
    %v1711 = vunpack.c.0.s8 %v1710
    %v1712 = vlaneseq
    %v1713 = vshrl.u32 %v1712, 7
    %v1714 = vsub.s32 %v1711, %v1713
    %v1715 = vrot.slane %v1707, %v1714
    %v1717 = vunpack.c.l.s4 1934713408
    %v1718 = vunpack.c.0.s8 %v1717
    %v1719 = vlaneseq
    %v1720 = vshrl.u32 %v1719, 7
    %v1721 = vsub.s32 %v1718, %v1720
    %v1722 = vrot.slane %v1708, %v1721
    %v1723 = vcombine.low %v1691, %v1706
    %v1724 = vcombine.high %v1691, %v1706
    %v1726 = vunpack.c.l.s4 1934713408
    %v1727 = vunpack.c.0.s8 %v1726
    %v1728 = vlaneseq
    %v1729 = vshrl.u32 %v1728, 7
    %v1730 = vsub.s32 %v1727, %v1729
    %v1731 = vrot.slane %v1723, %v1730
    %v1733 = vunpack.c.l.s4 1934713408
    %v1734 = vunpack.c.0.s8 %v1733
    %v1735 = vlaneseq
    %v1736 = vshrl.u32 %v1735, 7
    %v1737 = vsub.s32 %v1734, %v1736
    %v1738 = vrot.slane %v1724, %v1737
    %v1739 = vcombine.high %v1715, 0.0
    %v1740 = vcombine.high %v1722, 0.0
    %v1741 = vcombine.high %v1731, 0.0
    %v1742 = vcombine.high %v1738, 0.0
    %v1743 = vcombine.high %v87, 0.0
    %v1745 = vunpack.c.l.s4 1983009808
    %v1746 = vunpack.c.0.s8 %v1745
    %v1747 = vlaneseq
    %v1748 = vshrl.u32 %v1747, 7
    %v1749 = vsub.s32 %v1746, %v1748
    %v1750 = vrot.slane %v87, %v1749
    %v1752 = vunpack.c.l.s4 1983009808
    %v1753 = vunpack.c.0.s8 %v1752
    %v1754 = vlaneseq
    %v1755 = vshrl.u32 %v1754, 7
    %v1756 = vsub.s32 %v1753, %v1755
    %v1757 = vrot.slane %v1743, %v1756
    %v1758 = vcombine.high %v151, 0.0
    %v1760 = vunpack.c.l.s4 1983009808
    %v1761 = vunpack.c.0.s8 %v1760
    %v1762 = vlaneseq
    %v1763 = vshrl.u32 %v1762, 7
    %v1764 = vsub.s32 %v1761, %v1763
    %v1765 = vrot.slane %v151, %v1764
    %v1767 = vunpack.c.l.s4 1983009808
    %v1768 = vunpack.c.0.s8 %v1767
    %v1769 = vlaneseq
    %v1770 = vshrl.u32 %v1769, 7
    %v1771 = vsub.s32 %v1768, %v1770
    %v1772 = vrot.slane %v1758, %v1771
    %v1773 = vcombine.low %v1750, %v1765
    %v1774 = vcombine.high %v1750, %v1765
    %v1776 = vunpack.c.l.s4 1934713408
    %v1777 = vunpack.c.0.s8 %v1776
    %v1778 = vlaneseq
    %v1779 = vshrl.u32 %v1778, 7
    %v1780 = vsub.s32 %v1777, %v1779
    %v1781 = vrot.slane %v1773, %v1780
    %v1783 = vunpack.c.l.s4 1934713408
    %v1784 = vunpack.c.0.s8 %v1783
    %v1785 = vlaneseq
    %v1786 = vshrl.u32 %v1785, 7
    %v1787 = vsub.s32 %v1784, %v1786
    %v1788 = vrot.slane %v1774, %v1787
    %v1789 = vcombine.low %v1757, %v1772
    %v1790 = vcombine.high %v1757, %v1772
    %v1792 = vunpack.c.l.s4 1934713408
    %v1793 = vunpack.c.0.s8 %v1792
    %v1794 = vlaneseq
    %v1795 = vshrl.u32 %v1794, 7
    %v1796 = vsub.s32 %v1793, %v1795
    %v1797 = vrot.slane %v1789, %v1796
    %v1799 = vunpack.c.l.s4 1934713408
    %v1800 = vunpack.c.0.s8 %v1799
    %v1801 = vlaneseq
    %v1802 = vshrl.u32 %v1801, 7
    %v1803 = vsub.s32 %v1800, %v1802
    %v1804 = vrot.slane %v1790, %v1803
    %v1805 = vcombine.high %v1781, 0.0
    %v1806 = vcombine.high %v1788, 0.0
    %v1807 = vcombine.high %v1797, 0.0
    %v1808 = vcombine.high %v1804, 0.0
    %v1809 = vcombine.high %v88, 0.0
    %v1811 = vunpack.c.l.s4 1983009808
    %v1812 = vunpack.c.0.s8 %v1811
    %v1813 = vlaneseq
    %v1814 = vshrl.u32 %v1813, 7
    %v1815 = vsub.s32 %v1812, %v1814
    %v1816 = vrot.slane %v88, %v1815
    %v1818 = vunpack.c.l.s4 1983009808
    %v1819 = vunpack.c.0.s8 %v1818
    %v1820 = vlaneseq
    %v1821 = vshrl.u32 %v1820, 7
    %v1822 = vsub.s32 %v1819, %v1821
    %v1823 = vrot.slane %v1809, %v1822
    %v1824 = vcombine.high %v152, 0.0
    %v1826 = vunpack.c.l.s4 1983009808
    %v1827 = vunpack.c.0.s8 %v1826
    %v1828 = vlaneseq
    %v1829 = vshrl.u32 %v1828, 7
    %v1830 = vsub.s32 %v1827, %v1829
    %v1831 = vrot.slane %v152, %v1830
    %v1833 = vunpack.c.l.s4 1983009808
    %v1834 = vunpack.c.0.s8 %v1833
    %v1835 = vlaneseq
    %v1836 = vshrl.u32 %v1835, 7
    %v1837 = vsub.s32 %v1834, %v1836
    %v1838 = vrot.slane %v1824, %v1837
    %v1839 = vcombine.low %v1816, %v1831
    %v1840 = vcombine.high %v1816, %v1831
    %v1842 = vunpack.c.l.s4 1934713408
    %v1843 = vunpack.c.0.s8 %v1842
    %v1844 = vlaneseq
    %v1845 = vshrl.u32 %v1844, 7
    %v1846 = vsub.s32 %v1843, %v1845
    %v1847 = vrot.slane %v1839, %v1846
    %v1849 = vunpack.c.l.s4 1934713408
    %v1850 = vunpack.c.0.s8 %v1849
    %v1851 = vlaneseq
    %v1852 = vshrl.u32 %v1851, 7
    %v1853 = vsub.s32 %v1850, %v1852
    %v1854 = vrot.slane %v1840, %v1853
    %v1855 = vcombine.low %v1823, %v1838
    %v1856 = vcombine.high %v1823, %v1838
    %v1858 = vunpack.c.l.s4 1934713408
    %v1859 = vunpack.c.0.s8 %v1858
    %v1860 = vlaneseq
    %v1861 = vshrl.u32 %v1860, 7
    %v1862 = vsub.s32 %v1859, %v1861
    %v1863 = vrot.slane %v1855, %v1862
    %v1865 = vunpack.c.l.s4 1934713408
    %v1866 = vunpack.c.0.s8 %v1865
    %v1867 = vlaneseq
    %v1868 = vshrl.u32 %v1867, 7
    %v1869 = vsub.s32 %v1866, %v1868
    %v1870 = vrot.slane %v1856, %v1869
    %v1871 = vcombine.high %v1847, 0.0
    %v1872 = vcombine.high %v1854, 0.0
    %v1873 = vcombine.high %v1863, 0.0
    %v1874 = vcombine.high %v1870, 0.0
    %v1875 = vcombine.high %v89, 0.0
    %v1877 = vunpack.c.l.s4 1983009808
    %v1878 = vunpack.c.0.s8 %v1877
    %v1879 = vlaneseq
    %v1880 = vshrl.u32 %v1879, 7
    %v1881 = vsub.s32 %v1878, %v1880
    %v1882 = vrot.slane %v89, %v1881
    %v1884 = vunpack.c.l.s4 1983009808
    %v1885 = vunpack.c.0.s8 %v1884
    %v1886 = vlaneseq
    %v1887 = vshrl.u32 %v1886, 7
    %v1888 = vsub.s32 %v1885, %v1887
    %v1889 = vrot.slane %v1875, %v1888
    %v1890 = vcombine.high %v153, 0.0
    %v1892 = vunpack.c.l.s4 1983009808
    %v1893 = vunpack.c.0.s8 %v1892
    %v1894 = vlaneseq
    %v1895 = vshrl.u32 %v1894, 7
    %v1896 = vsub.s32 %v1893, %v1895
    %v1897 = vrot.slane %v153, %v1896
    %v1899 = vunpack.c.l.s4 1983009808
    %v1900 = vunpack.c.0.s8 %v1899
    %v1901 = vlaneseq
    %v1902 = vshrl.u32 %v1901, 7
    %v1903 = vsub.s32 %v1900, %v1902
    %v1904 = vrot.slane %v1890, %v1903
    %v1905 = vcombine.low %v1882, %v1897
    %v1906 = vcombine.high %v1882, %v1897
    %v1908 = vunpack.c.l.s4 1934713408
    %v1909 = vunpack.c.0.s8 %v1908
    %v1910 = vlaneseq
    %v1911 = vshrl.u32 %v1910, 7
    %v1912 = vsub.s32 %v1909, %v1911
    %v1913 = vrot.slane %v1905, %v1912
    %v1915 = vunpack.c.l.s4 1934713408
    %v1916 = vunpack.c.0.s8 %v1915
    %v1917 = vlaneseq
    %v1918 = vshrl.u32 %v1917, 7
    %v1919 = vsub.s32 %v1916, %v1918
    %v1920 = vrot.slane %v1906, %v1919
    %v1921 = vcombine.low %v1889, %v1904
    %v1922 = vcombine.high %v1889, %v1904
    %v1924 = vunpack.c.l.s4 1934713408
    %v1925 = vunpack.c.0.s8 %v1924
    %v1926 = vlaneseq
    %v1927 = vshrl.u32 %v1926, 7
    %v1928 = vsub.s32 %v1925, %v1927
    %v1929 = vrot.slane %v1921, %v1928
    %v1931 = vunpack.c.l.s4 1934713408
    %v1932 = vunpack.c.0.s8 %v1931
    %v1933 = vlaneseq
    %v1934 = vshrl.u32 %v1933, 7
    %v1935 = vsub.s32 %v1932, %v1934
    %v1936 = vrot.slane %v1922, %v1935
    %v1937 = vcombine.high %v1913, 0.0
    %v1938 = vcombine.high %v1920, 0.0
    %v1939 = vcombine.high %v1929, 0.0
    %v1940 = vcombine.high %v1936, 0.0
    %v1941 = vcombine.high %v90, 0.0
    %v1943 = vunpack.c.l.s4 1983009808
    %v1944 = vunpack.c.0.s8 %v1943
    %v1945 = vlaneseq
    %v1946 = vshrl.u32 %v1945, 7
    %v1947 = vsub.s32 %v1944, %v1946
    %v1948 = vrot.slane %v90, %v1947
    %v1950 = vunpack.c.l.s4 1983009808
    %v1951 = vunpack.c.0.s8 %v1950
    %v1952 = vlaneseq
    %v1953 = vshrl.u32 %v1952, 7
    %v1954 = vsub.s32 %v1951, %v1953
    %v1955 = vrot.slane %v1941, %v1954
    %v1956 = vcombine.high %v154, 0.0
    %v1958 = vunpack.c.l.s4 1983009808
    %v1959 = vunpack.c.0.s8 %v1958
    %v1960 = vlaneseq
    %v1961 = vshrl.u32 %v1960, 7
    %v1962 = vsub.s32 %v1959, %v1961
    %v1963 = vrot.slane %v154, %v1962
    %v1965 = vunpack.c.l.s4 1983009808
    %v1966 = vunpack.c.0.s8 %v1965
    %v1967 = vlaneseq
    %v1968 = vshrl.u32 %v1967, 7
    %v1969 = vsub.s32 %v1966, %v1968
    %v1970 = vrot.slane %v1956, %v1969
    %v1971 = vcombine.low %v1948, %v1963
    %v1972 = vcombine.high %v1948, %v1963
    %v1974 = vunpack.c.l.s4 1934713408
    %v1975 = vunpack.c.0.s8 %v1974
    %v1976 = vlaneseq
    %v1977 = vshrl.u32 %v1976, 7
    %v1978 = vsub.s32 %v1975, %v1977
    %v1979 = vrot.slane %v1971, %v1978
    %v1981 = vunpack.c.l.s4 1934713408
    %v1982 = vunpack.c.0.s8 %v1981
    %v1983 = vlaneseq
    %v1984 = vshrl.u32 %v1983, 7
    %v1985 = vsub.s32 %v1982, %v1984
    %v1986 = vrot.slane %v1972, %v1985
    %v1987 = vcombine.low %v1955, %v1970
    %v1988 = vcombine.high %v1955, %v1970
    %v1990 = vunpack.c.l.s4 1934713408
    %v1991 = vunpack.c.0.s8 %v1990
    %v1992 = vlaneseq
    %v1993 = vshrl.u32 %v1992, 7
    %v1994 = vsub.s32 %v1991, %v1993
    %v1995 = vrot.slane %v1987, %v1994
    %v1997 = vunpack.c.l.s4 1934713408
    %v1998 = vunpack.c.0.s8 %v1997
    %v1999 = vlaneseq
    %v2000 = vshrl.u32 %v1999, 7
    %v2001 = vsub.s32 %v1998, %v2000
    %v2002 = vrot.slane %v1988, %v2001
    %v2003 = vcombine.high %v1979, 0.0
    %v2004 = vcombine.high %v1986, 0.0
    %v2005 = vcombine.high %v1995, 0.0
    %v2006 = vcombine.high %v2002, 0.0
    %v2007 = vcombine.high %v91, 0.0
    %v2009 = vunpack.c.l.s4 1983009808
    %v2010 = vunpack.c.0.s8 %v2009
    %v2011 = vlaneseq
    %v2012 = vshrl.u32 %v2011, 7
    %v2013 = vsub.s32 %v2010, %v2012
    %v2014 = vrot.slane %v91, %v2013
    %v2016 = vunpack.c.l.s4 1983009808
    %v2017 = vunpack.c.0.s8 %v2016
    %v2018 = vlaneseq
    %v2019 = vshrl.u32 %v2018, 7
    %v2020 = vsub.s32 %v2017, %v2019
    %v2021 = vrot.slane %v2007, %v2020
    %v2022 = vcombine.high %v155, 0.0
    %v2024 = vunpack.c.l.s4 1983009808
    %v2025 = vunpack.c.0.s8 %v2024
    %v2026 = vlaneseq
    %v2027 = vshrl.u32 %v2026, 7
    %v2028 = vsub.s32 %v2025, %v2027
    %v2029 = vrot.slane %v155, %v2028
    %v2031 = vunpack.c.l.s4 1983009808
    %v2032 = vunpack.c.0.s8 %v2031
    %v2033 = vlaneseq
    %v2034 = vshrl.u32 %v2033, 7
    %v2035 = vsub.s32 %v2032, %v2034
    %v2036 = vrot.slane %v2022, %v2035
    %v2037 = vcombine.low %v2014, %v2029
    %v2038 = vcombine.high %v2014, %v2029
    %v2040 = vunpack.c.l.s4 1934713408
    %v2041 = vunpack.c.0.s8 %v2040
    %v2042 = vlaneseq
    %v2043 = vshrl.u32 %v2042, 7
    %v2044 = vsub.s32 %v2041, %v2043
    %v2045 = vrot.slane %v2037, %v2044
    %v2047 = vunpack.c.l.s4 1934713408
    %v2048 = vunpack.c.0.s8 %v2047
    %v2049 = vlaneseq
    %v2050 = vshrl.u32 %v2049, 7
    %v2051 = vsub.s32 %v2048, %v2050
    %v2052 = vrot.slane %v2038, %v2051
    %v2053 = vcombine.low %v2021, %v2036
    %v2054 = vcombine.high %v2021, %v2036
    %v2056 = vunpack.c.l.s4 1934713408
    %v2057 = vunpack.c.0.s8 %v2056
    %v2058 = vlaneseq
    %v2059 = vshrl.u32 %v2058, 7
    %v2060 = vsub.s32 %v2057, %v2059
    %v2061 = vrot.slane %v2053, %v2060
    %v2063 = vunpack.c.l.s4 1934713408
    %v2064 = vunpack.c.0.s8 %v2063
    %v2065 = vlaneseq
    %v2066 = vshrl.u32 %v2065, 7
    %v2067 = vsub.s32 %v2064, %v2066
    %v2068 = vrot.slane %v2054, %v2067
    %v2069 = vcombine.high %v2045, 0.0
    %v2070 = vcombine.high %v2052, 0.0
    %v2071 = vcombine.high %v2061, 0.0
    %v2072 = vcombine.high %v2068, 0.0
    %v2073 = vcombine.high %v92, 0.0
    %v2075 = vunpack.c.l.s4 1983009808
    %v2076 = vunpack.c.0.s8 %v2075
    %v2077 = vlaneseq
    %v2078 = vshrl.u32 %v2077, 7
    %v2079 = vsub.s32 %v2076, %v2078
    %v2080 = vrot.slane %v92, %v2079
    %v2082 = vunpack.c.l.s4 1983009808
    %v2083 = vunpack.c.0.s8 %v2082
    %v2084 = vlaneseq
    %v2085 = vshrl.u32 %v2084, 7
    %v2086 = vsub.s32 %v2083, %v2085
    %v2087 = vrot.slane %v2073, %v2086
    %v2088 = vcombine.high %v156, 0.0
    %v2090 = vunpack.c.l.s4 1983009808
    %v2091 = vunpack.c.0.s8 %v2090
    %v2092 = vlaneseq
    %v2093 = vshrl.u32 %v2092, 7
    %v2094 = vsub.s32 %v2091, %v2093
    %v2095 = vrot.slane %v156, %v2094
    %v2097 = vunpack.c.l.s4 1983009808
    %v2098 = vunpack.c.0.s8 %v2097
    %v2099 = vlaneseq
    %v2100 = vshrl.u32 %v2099, 7
    %v2101 = vsub.s32 %v2098, %v2100
    %v2102 = vrot.slane %v2088, %v2101
    %v2103 = vcombine.low %v2080, %v2095
    %v2104 = vcombine.high %v2080, %v2095
    %v2106 = vunpack.c.l.s4 1934713408
    %v2107 = vunpack.c.0.s8 %v2106
    %v2108 = vlaneseq
    %v2109 = vshrl.u32 %v2108, 7
    %v2110 = vsub.s32 %v2107, %v2109
    %v2111 = vrot.slane %v2103, %v2110
    %v2113 = vunpack.c.l.s4 1934713408
    %v2114 = vunpack.c.0.s8 %v2113
    %v2115 = vlaneseq
    %v2116 = vshrl.u32 %v2115, 7
    %v2117 = vsub.s32 %v2114, %v2116
    %v2118 = vrot.slane %v2104, %v2117
    %v2119 = vcombine.low %v2087, %v2102
    %v2120 = vcombine.high %v2087, %v2102
    %v2122 = vunpack.c.l.s4 1934713408
    %v2123 = vunpack.c.0.s8 %v2122
    %v2124 = vlaneseq
    %v2125 = vshrl.u32 %v2124, 7
    %v2126 = vsub.s32 %v2123, %v2125
    %v2127 = vrot.slane %v2119, %v2126
    %v2129 = vunpack.c.l.s4 1934713408
    %v2130 = vunpack.c.0.s8 %v2129
    %v2131 = vlaneseq
    %v2132 = vshrl.u32 %v2131, 7
    %v2133 = vsub.s32 %v2130, %v2132
    %v2134 = vrot.slane %v2120, %v2133
    %v2135 = vcombine.high %v2111, 0.0
    %v2136 = vcombine.high %v2118, 0.0
    %v2137 = vcombine.high %v2127, 0.0
    %v2138 = vcombine.high %v2134, 0.0
    %v2139 = vcombine.high %v93, 0.0
    %v2141 = vunpack.c.l.s4 1983009808
    %v2142 = vunpack.c.0.s8 %v2141
    %v2143 = vlaneseq
    %v2144 = vshrl.u32 %v2143, 7
    %v2145 = vsub.s32 %v2142, %v2144
    %v2146 = vrot.slane %v93, %v2145
    %v2148 = vunpack.c.l.s4 1983009808
    %v2149 = vunpack.c.0.s8 %v2148
    %v2150 = vlaneseq
    %v2151 = vshrl.u32 %v2150, 7
    %v2152 = vsub.s32 %v2149, %v2151
    %v2153 = vrot.slane %v2139, %v2152
    %v2154 = vcombine.high %v157, 0.0
    %v2156 = vunpack.c.l.s4 1983009808
    %v2157 = vunpack.c.0.s8 %v2156
    %v2158 = vlaneseq
    %v2159 = vshrl.u32 %v2158, 7
    %v2160 = vsub.s32 %v2157, %v2159
    %v2161 = vrot.slane %v157, %v2160
    %v2163 = vunpack.c.l.s4 1983009808
    %v2164 = vunpack.c.0.s8 %v2163
    %v2165 = vlaneseq
    %v2166 = vshrl.u32 %v2165, 7
    %v2167 = vsub.s32 %v2164, %v2166
    %v2168 = vrot.slane %v2154, %v2167
    %v2169 = vcombine.low %v2146, %v2161
    %v2170 = vcombine.high %v2146, %v2161
    %v2172 = vunpack.c.l.s4 1934713408
    %v2173 = vunpack.c.0.s8 %v2172
    %v2174 = vlaneseq
    %v2175 = vshrl.u32 %v2174, 7
    %v2176 = vsub.s32 %v2173, %v2175
    %v2177 = vrot.slane %v2169, %v2176
    %v2179 = vunpack.c.l.s4 1934713408
    %v2180 = vunpack.c.0.s8 %v2179
    %v2181 = vlaneseq
    %v2182 = vshrl.u32 %v2181, 7
    %v2183 = vsub.s32 %v2180, %v2182
    %v2184 = vrot.slane %v2170, %v2183
    %v2185 = vcombine.low %v2153, %v2168
    %v2186 = vcombine.high %v2153, %v2168
    %v2188 = vunpack.c.l.s4 1934713408
    %v2189 = vunpack.c.0.s8 %v2188
    %v2190 = vlaneseq
    %v2191 = vshrl.u32 %v2190, 7
    %v2192 = vsub.s32 %v2189, %v2191
    %v2193 = vrot.slane %v2185, %v2192
    %v2195 = vunpack.c.l.s4 1934713408
    %v2196 = vunpack.c.0.s8 %v2195
    %v2197 = vlaneseq
    %v2198 = vshrl.u32 %v2197, 7
    %v2199 = vsub.s32 %v2196, %v2198
    %v2200 = vrot.slane %v2186, %v2199
    %v2201 = vcombine.high %v2177, 0.0
    %v2202 = vcombine.high %v2184, 0.0
    %v2203 = vcombine.high %v2193, 0.0
    %v2204 = vcombine.high %v2200, 0.0
    %v2205 = vcombine.high %v94, 0.0
    %v2207 = vunpack.c.l.s4 1983009808
    %v2208 = vunpack.c.0.s8 %v2207
    %v2209 = vlaneseq
    %v2210 = vshrl.u32 %v2209, 7
    %v2211 = vsub.s32 %v2208, %v2210
    %v2212 = vrot.slane %v94, %v2211
    %v2214 = vunpack.c.l.s4 1983009808
    %v2215 = vunpack.c.0.s8 %v2214
    %v2216 = vlaneseq
    %v2217 = vshrl.u32 %v2216, 7
    %v2218 = vsub.s32 %v2215, %v2217
    %v2219 = vrot.slane %v2205, %v2218
    %v2220 = vcombine.high %v158, 0.0
    %v2222 = vunpack.c.l.s4 1983009808
    %v2223 = vunpack.c.0.s8 %v2222
    %v2224 = vlaneseq
    %v2225 = vshrl.u32 %v2224, 7
    %v2226 = vsub.s32 %v2223, %v2225
    %v2227 = vrot.slane %v158, %v2226
    %v2229 = vunpack.c.l.s4 1983009808
    %v2230 = vunpack.c.0.s8 %v2229
    %v2231 = vlaneseq
    %v2232 = vshrl.u32 %v2231, 7
    %v2233 = vsub.s32 %v2230, %v2232
    %v2234 = vrot.slane %v2220, %v2233
    %v2235 = vcombine.low %v2212, %v2227
    %v2236 = vcombine.high %v2212, %v2227
    %v2238 = vunpack.c.l.s4 1934713408
    %v2239 = vunpack.c.0.s8 %v2238
    %v2240 = vlaneseq
    %v2241 = vshrl.u32 %v2240, 7
    %v2242 = vsub.s32 %v2239, %v2241
    %v2243 = vrot.slane %v2235, %v2242
    %v2245 = vunpack.c.l.s4 1934713408
    %v2246 = vunpack.c.0.s8 %v2245
    %v2247 = vlaneseq
    %v2248 = vshrl.u32 %v2247, 7
    %v2249 = vsub.s32 %v2246, %v2248
    %v2250 = vrot.slane %v2236, %v2249
    %v2251 = vcombine.low %v2219, %v2234
    %v2252 = vcombine.high %v2219, %v2234
    %v2254 = vunpack.c.l.s4 1934713408
    %v2255 = vunpack.c.0.s8 %v2254
    %v2256 = vlaneseq
    %v2257 = vshrl.u32 %v2256, 7
    %v2258 = vsub.s32 %v2255, %v2257
    %v2259 = vrot.slane %v2251, %v2258
    %v2261 = vunpack.c.l.s4 1934713408
    %v2262 = vunpack.c.0.s8 %v2261
    %v2263 = vlaneseq
    %v2264 = vshrl.u32 %v2263, 7
    %v2265 = vsub.s32 %v2262, %v2264
    %v2266 = vrot.slane %v2252, %v2265
    %v2267 = vcombine.high %v2243, 0.0
    %v2268 = vcombine.high %v2250, 0.0
    %v2269 = vcombine.high %v2259, 0.0
    %v2270 = vcombine.high %v2266, 0.0
    %2272 = vrot.lane.b32.xlu0 %v221, 4
    %v2273 = vpop.permute.xlu0 %2272
    %2276 = vrot.lane.b32.xlu0 %v204, 8
    %v2277 = vpop.permute.xlu0 %2276
    %2280 = vrot.lane.b32.xlu0 %v222, 12
    %v2281 = vpop.permute.xlu0 %2280
    %2284 = vrot.lane.b32.xlu0 %v213, 16
    %v2285 = vpop.permute.xlu0 %2284
    %2288 = vrot.lane.b32.xlu0 %v223, 20
    %v2289 = vpop.permute.xlu0 %2288
    %2292 = vrot.lane.b32.xlu0 %v220, 24
    %v2293 = vpop.permute.xlu0 %2292
    %2296 = vrot.lane.b32.xlu0 %v224, 28
    %v2297 = vpop.permute.xlu0 %2296
    %2300 = vrot.lane.b32.xlu0 %v263, 32
    %v2301 = vpop.permute.xlu0 %2300
    %2304 = vrot.lane.b32.xlu0 %v287, 36
    %v2305 = vpop.permute.xlu0 %2304
    %2308 = vrot.lane.b32.xlu0 %v270, 40
    %v2309 = vpop.permute.xlu0 %2308
    %2312 = vrot.lane.b32.xlu0 %v288, 44
    %v2313 = vpop.permute.xlu0 %2312
    %2316 = vrot.lane.b32.xlu0 %v279, 48
    %v2317 = vpop.permute.xlu0 %2316
    %2320 = vrot.lane.b32.xlu0 %v289, 52
    %v2321 = vpop.permute.xlu0 %2320
    %2324 = vrot.lane.b32.xlu0 %v286, 56
    %v2325 = vpop.permute.xlu0 %2324
    %2328 = vrot.lane.b32.xlu0 %v290, 60
    %v2329 = vpop.permute.xlu0 %2328
    %2332 = vrot.lane.b32.xlu0 %v329, 64
    %v2333 = vpop.permute.xlu0 %2332
    %2336 = vrot.lane.b32.xlu0 %v353, 68
    %v2337 = vpop.permute.xlu0 %2336
    %2340 = vrot.lane.b32.xlu0 %v336, 72
    %v2341 = vpop.permute.xlu0 %2340
    %2344 = vrot.lane.b32.xlu0 %v354, 76
    %v2345 = vpop.permute.xlu0 %2344
    %2348 = vrot.lane.b32.xlu0 %v345, 80
    %v2349 = vpop.permute.xlu0 %2348
    %2352 = vrot.lane.b32.xlu0 %v355, 84
    %v2353 = vpop.permute.xlu0 %2352
    %2356 = vrot.lane.b32.xlu0 %v352, 88
    %v2357 = vpop.permute.xlu0 %2356
    %2360 = vrot.lane.b32.xlu0 %v356, 92
    %v2361 = vpop.permute.xlu0 %2360
    %2364 = vrot.lane.b32.xlu0 %v395, 96
    %v2365 = vpop.permute.xlu0 %2364
    %2368 = vrot.lane.b32.xlu0 %v419, 100
    %v2369 = vpop.permute.xlu0 %2368
    %2372 = vrot.lane.b32.xlu0 %v402, 104
    %v2373 = vpop.permute.xlu0 %2372
    %2376 = vrot.lane.b32.xlu0 %v420, 108
    %v2377 = vpop.permute.xlu0 %2376
    %2380 = vrot.lane.b32.xlu0 %v411, 112
    %v2381 = vpop.permute.xlu0 %2380
    %2384 = vrot.lane.b32.xlu0 %v421, 116
    %v2385 = vpop.permute.xlu0 %2384
    %2388 = vrot.lane.b32.xlu0 %v418, 120
    %v2389 = vpop.permute.xlu0 %2388
    %2392 = vrot.lane.b32.xlu0 %v422, 124
    %v2393 = vpop.permute.xlu0 %2392
    %2396 = vrot.lane.b32.xlu0 %v485, 4
    %v2397 = vpop.permute.xlu0 %2396
    %2400 = vrot.lane.b32.xlu0 %v468, 8
    %v2401 = vpop.permute.xlu0 %2400
    %2404 = vrot.lane.b32.xlu0 %v486, 12
    %v2405 = vpop.permute.xlu0 %2404
    %2408 = vrot.lane.b32.xlu0 %v477, 16
    %v2409 = vpop.permute.xlu0 %2408
    %2412 = vrot.lane.b32.xlu0 %v487, 20
    %v2413 = vpop.permute.xlu0 %2412
    %2416 = vrot.lane.b32.xlu0 %v484, 24
    %v2417 = vpop.permute.xlu0 %2416
    %2420 = vrot.lane.b32.xlu0 %v488, 28
    %v2421 = vpop.permute.xlu0 %2420
    %2424 = vrot.lane.b32.xlu0 %v527, 32
    %v2425 = vpop.permute.xlu0 %2424
    %2428 = vrot.lane.b32.xlu0 %v551, 36
    %v2429 = vpop.permute.xlu0 %2428
    %2432 = vrot.lane.b32.xlu0 %v534, 40
    %v2433 = vpop.permute.xlu0 %2432
    %2436 = vrot.lane.b32.xlu0 %v552, 44
    %v2437 = vpop.permute.xlu0 %2436
    %2440 = vrot.lane.b32.xlu0 %v543, 48
    %v2441 = vpop.permute.xlu0 %2440
    %2444 = vrot.lane.b32.xlu0 %v553, 52
    %v2445 = vpop.permute.xlu0 %2444
    %2448 = vrot.lane.b32.xlu0 %v550, 56
    %v2449 = vpop.permute.xlu0 %2448
    %2452 = vrot.lane.b32.xlu0 %v554, 60
    %v2453 = vpop.permute.xlu0 %2452
    %2456 = vrot.lane.b32.xlu0 %v593, 64
    %v2457 = vpop.permute.xlu0 %2456
    %2460 = vrot.lane.b32.xlu0 %v617, 68
    %v2461 = vpop.permute.xlu0 %2460
    %2464 = vrot.lane.b32.xlu0 %v600, 72
    %v2465 = vpop.permute.xlu0 %2464
    %2468 = vrot.lane.b32.xlu0 %v618, 76
    %v2469 = vpop.permute.xlu0 %2468
    %2472 = vrot.lane.b32.xlu0 %v609, 80
    %v2473 = vpop.permute.xlu0 %2472
    %2476 = vrot.lane.b32.xlu0 %v619, 84
    %v2477 = vpop.permute.xlu0 %2476
    %2480 = vrot.lane.b32.xlu0 %v616, 88
    %v2481 = vpop.permute.xlu0 %2480
    %2484 = vrot.lane.b32.xlu0 %v620, 92
    %v2485 = vpop.permute.xlu0 %2484
    %2488 = vrot.lane.b32.xlu0 %v659, 96
    %v2489 = vpop.permute.xlu0 %2488
    %2492 = vrot.lane.b32.xlu0 %v683, 100
    %v2493 = vpop.permute.xlu0 %2492
    %2496 = vrot.lane.b32.xlu0 %v666, 104
    %v2497 = vpop.permute.xlu0 %2496
    %2500 = vrot.lane.b32.xlu0 %v684, 108
    %v2501 = vpop.permute.xlu0 %2500
    %2504 = vrot.lane.b32.xlu0 %v675, 112
    %v2505 = vpop.permute.xlu0 %2504
    %2508 = vrot.lane.b32.xlu0 %v685, 116
    %v2509 = vpop.permute.xlu0 %2508
    %2512 = vrot.lane.b32.xlu0 %v682, 120
    %v2513 = vpop.permute.xlu0 %2512
    %2516 = vrot.lane.b32.xlu0 %v686, 124
    %v2517 = vpop.permute.xlu0 %2516
    %2520 = vrot.lane.b32.xlu0 %v749, 4
    %v2521 = vpop.permute.xlu0 %2520
    %2524 = vrot.lane.b32.xlu0 %v732, 8
    %v2525 = vpop.permute.xlu0 %2524
    %2528 = vrot.lane.b32.xlu0 %v750, 12
    %v2529 = vpop.permute.xlu0 %2528
    %2532 = vrot.lane.b32.xlu0 %v741, 16
    %v2533 = vpop.permute.xlu0 %2532
    %2536 = vrot.lane.b32.xlu0 %v751, 20
    %v2537 = vpop.permute.xlu0 %2536
    %2540 = vrot.lane.b32.xlu0 %v748, 24
    %v2541 = vpop.permute.xlu0 %2540
    %2544 = vrot.lane.b32.xlu0 %v752, 28
    %v2545 = vpop.permute.xlu0 %2544
    %2548 = vrot.lane.b32.xlu0 %v791, 32
    %v2549 = vpop.permute.xlu0 %2548
    %2552 = vrot.lane.b32.xlu0 %v815, 36
    %v2553 = vpop.permute.xlu0 %2552
    %2556 = vrot.lane.b32.xlu0 %v798, 40
    %v2557 = vpop.permute.xlu0 %2556
    %2560 = vrot.lane.b32.xlu0 %v816, 44
    %v2561 = vpop.permute.xlu0 %2560
    %2564 = vrot.lane.b32.xlu0 %v807, 48
    %v2565 = vpop.permute.xlu0 %2564
    %2568 = vrot.lane.b32.xlu0 %v817, 52
    %v2569 = vpop.permute.xlu0 %2568
    %2572 = vrot.lane.b32.xlu0 %v814, 56
    %v2573 = vpop.permute.xlu0 %2572
    %2576 = vrot.lane.b32.xlu0 %v818, 60
    %v2577 = vpop.permute.xlu0 %2576
    %2580 = vrot.lane.b32.xlu0 %v857, 64
    %v2581 = vpop.permute.xlu0 %2580
    %2584 = vrot.lane.b32.xlu0 %v881, 68
    %v2585 = vpop.permute.xlu0 %2584
    %2588 = vrot.lane.b32.xlu0 %v864, 72
    %v2589 = vpop.permute.xlu0 %2588
    %2592 = vrot.lane.b32.xlu0 %v882, 76
    %v2593 = vpop.permute.xlu0 %2592
    %2596 = vrot.lane.b32.xlu0 %v873, 80
    %v2597 = vpop.permute.xlu0 %2596
    %2600 = vrot.lane.b32.xlu0 %v883, 84
    %v2601 = vpop.permute.xlu0 %2600
    %2604 = vrot.lane.b32.xlu0 %v880, 88
    %v2605 = vpop.permute.xlu0 %2604
    %2608 = vrot.lane.b32.xlu0 %v884, 92
    %v2609 = vpop.permute.xlu0 %2608
    %2612 = vrot.lane.b32.xlu0 %v923, 96
    %v2613 = vpop.permute.xlu0 %2612
    %2616 = vrot.lane.b32.xlu0 %v947, 100
    %v2617 = vpop.permute.xlu0 %2616
    %2620 = vrot.lane.b32.xlu0 %v930, 104
    %v2621 = vpop.permute.xlu0 %2620
    %2624 = vrot.lane.b32.xlu0 %v948, 108
    %v2625 = vpop.permute.xlu0 %2624
    %2628 = vrot.lane.b32.xlu0 %v939, 112
    %v2629 = vpop.permute.xlu0 %2628
    %2632 = vrot.lane.b32.xlu0 %v949, 116
    %v2633 = vpop.permute.xlu0 %2632
    %2636 = vrot.lane.b32.xlu0 %v946, 120
    %v2637 = vpop.permute.xlu0 %2636
    %2640 = vrot.lane.b32.xlu0 %v950, 124
    %v2641 = vpop.permute.xlu0 %2640
    %2644 = vrot.lane.b32.xlu0 %v1013, 4
    %v2645 = vpop.permute.xlu0 %2644
    %2648 = vrot.lane.b32.xlu0 %v996, 8
    %v2649 = vpop.permute.xlu0 %2648
    %2652 = vrot.lane.b32.xlu0 %v1014, 12
    %v2653 = vpop.permute.xlu0 %2652
    %2656 = vrot.lane.b32.xlu0 %v1005, 16
    %v2657 = vpop.permute.xlu0 %2656
    %2660 = vrot.lane.b32.xlu0 %v1015, 20
    %v2661 = vpop.permute.xlu0 %2660
    %2664 = vrot.lane.b32.xlu0 %v1012, 24
    %v2665 = vpop.permute.xlu0 %2664
    %2668 = vrot.lane.b32.xlu0 %v1016, 28
    %v2669 = vpop.permute.xlu0 %2668
    %2672 = vrot.lane.b32.xlu0 %v1055, 32
    %v2673 = vpop.permute.xlu0 %2672
    %2676 = vrot.lane.b32.xlu0 %v1079, 36
    %v2677 = vpop.permute.xlu0 %2676
    %2680 = vrot.lane.b32.xlu0 %v1062, 40
    %v2681 = vpop.permute.xlu0 %2680
    %2684 = vrot.lane.b32.xlu0 %v1080, 44
    %v2685 = vpop.permute.xlu0 %2684
    %2688 = vrot.lane.b32.xlu0 %v1071, 48
    %v2689 = vpop.permute.xlu0 %2688
    %2692 = vrot.lane.b32.xlu0 %v1081, 52
    %v2693 = vpop.permute.xlu0 %2692
    %2696 = vrot.lane.b32.xlu0 %v1078, 56
    %v2697 = vpop.permute.xlu0 %2696
    %2700 = vrot.lane.b32.xlu0 %v1082, 60
    %v2701 = vpop.permute.xlu0 %2700
    %2704 = vrot.lane.b32.xlu0 %v1121, 64
    %v2705 = vpop.permute.xlu0 %2704
    %2708 = vrot.lane.b32.xlu0 %v1145, 68
    %v2709 = vpop.permute.xlu0 %2708
    %2712 = vrot.lane.b32.xlu0 %v1128, 72
    %v2713 = vpop.permute.xlu0 %2712
    %2716 = vrot.lane.b32.xlu0 %v1146, 76
    %v2717 = vpop.permute.xlu0 %2716
    %2720 = vrot.lane.b32.xlu0 %v1137, 80
    %v2721 = vpop.permute.xlu0 %2720
    %2724 = vrot.lane.b32.xlu0 %v1147, 84
    %v2725 = vpop.permute.xlu0 %2724
    %2728 = vrot.lane.b32.xlu0 %v1144, 88
    %v2729 = vpop.permute.xlu0 %2728
    %2732 = vrot.lane.b32.xlu0 %v1148, 92
    %v2733 = vpop.permute.xlu0 %2732
    %2736 = vrot.lane.b32.xlu0 %v1187, 96
    %v2737 = vpop.permute.xlu0 %2736
    %2740 = vrot.lane.b32.xlu0 %v1211, 100
    %v2741 = vpop.permute.xlu0 %2740
    %2744 = vrot.lane.b32.xlu0 %v1194, 104
    %v2745 = vpop.permute.xlu0 %2744
    %2748 = vrot.lane.b32.xlu0 %v1212, 108
    %v2749 = vpop.permute.xlu0 %2748
    %2752 = vrot.lane.b32.xlu0 %v1203, 112
    %v2753 = vpop.permute.xlu0 %2752
    %2756 = vrot.lane.b32.xlu0 %v1213, 116
    %v2757 = vpop.permute.xlu0 %2756
    %2760 = vrot.lane.b32.xlu0 %v1210, 120
    %v2761 = vpop.permute.xlu0 %2760
    %2764 = vrot.lane.b32.xlu0 %v1214, 124
    %v2765 = vpop.permute.xlu0 %2764
    %2768 = vrot.lane.b32.xlu0 %v1277, 4
    %v2769 = vpop.permute.xlu0 %2768
    %2772 = vrot.lane.b32.xlu0 %v1260, 8
    %v2773 = vpop.permute.xlu0 %2772
    %2776 = vrot.lane.b32.xlu0 %v1278, 12
    %v2777 = vpop.permute.xlu0 %2776
    %2780 = vrot.lane.b32.xlu0 %v1269, 16
    %v2781 = vpop.permute.xlu0 %2780
    %2784 = vrot.lane.b32.xlu0 %v1279, 20
    %v2785 = vpop.permute.xlu0 %2784
    %2788 = vrot.lane.b32.xlu0 %v1276, 24
    %v2789 = vpop.permute.xlu0 %2788
    %2792 = vrot.lane.b32.xlu0 %v1280, 28
    %v2793 = vpop.permute.xlu0 %2792
    %2796 = vrot.lane.b32.xlu0 %v1319, 32
    %v2797 = vpop.permute.xlu0 %2796
    %2800 = vrot.lane.b32.xlu0 %v1343, 36
    %v2801 = vpop.permute.xlu0 %2800
    %2804 = vrot.lane.b32.xlu0 %v1326, 40
    %v2805 = vpop.permute.xlu0 %2804
    %2808 = vrot.lane.b32.xlu0 %v1344, 44
    %v2809 = vpop.permute.xlu0 %2808
    %2812 = vrot.lane.b32.xlu0 %v1335, 48
    %v2813 = vpop.permute.xlu0 %2812
    %2816 = vrot.lane.b32.xlu0 %v1345, 52
    %v2817 = vpop.permute.xlu0 %2816
    %2820 = vrot.lane.b32.xlu0 %v1342, 56
    %v2821 = vpop.permute.xlu0 %2820
    %2824 = vrot.lane.b32.xlu0 %v1346, 60
    %v2825 = vpop.permute.xlu0 %2824
    %2828 = vrot.lane.b32.xlu0 %v1385, 64
    %v2829 = vpop.permute.xlu0 %2828
    %2832 = vrot.lane.b32.xlu0 %v1409, 68
    %v2833 = vpop.permute.xlu0 %2832
    %2836 = vrot.lane.b32.xlu0 %v1392, 72
    %v2837 = vpop.permute.xlu0 %2836
    %2840 = vrot.lane.b32.xlu0 %v1410, 76
    %v2841 = vpop.permute.xlu0 %2840
    %2844 = vrot.lane.b32.xlu0 %v1401, 80
    %v2845 = vpop.permute.xlu0 %2844
    %2848 = vrot.lane.b32.xlu0 %v1411, 84
    %v2849 = vpop.permute.xlu0 %2848
    %2852 = vrot.lane.b32.xlu0 %v1408, 88
    %v2853 = vpop.permute.xlu0 %2852
    %2856 = vrot.lane.b32.xlu0 %v1412, 92
    %v2857 = vpop.permute.xlu0 %2856
    %2860 = vrot.lane.b32.xlu0 %v1451, 96
    %v2861 = vpop.permute.xlu0 %2860
    %2864 = vrot.lane.b32.xlu0 %v1475, 100
    %v2865 = vpop.permute.xlu0 %2864
    %2868 = vrot.lane.b32.xlu0 %v1458, 104
    %v2869 = vpop.permute.xlu0 %2868
    %2872 = vrot.lane.b32.xlu0 %v1476, 108
    %v2873 = vpop.permute.xlu0 %2872
    %2876 = vrot.lane.b32.xlu0 %v1467, 112
    %v2877 = vpop.permute.xlu0 %2876
    %2880 = vrot.lane.b32.xlu0 %v1477, 116
    %v2881 = vpop.permute.xlu0 %2880
    %2884 = vrot.lane.b32.xlu0 %v1474, 120
    %v2885 = vpop.permute.xlu0 %2884
    %2888 = vrot.lane.b32.xlu0 %v1478, 124
    %v2889 = vpop.permute.xlu0 %2888
    %2892 = vrot.lane.b32.xlu0 %v1541, 4
    %v2893 = vpop.permute.xlu0 %2892
    %2896 = vrot.lane.b32.xlu0 %v1524, 8
    %v2897 = vpop.permute.xlu0 %2896
    %2900 = vrot.lane.b32.xlu0 %v1542, 12
    %v2901 = vpop.permute.xlu0 %2900
    %2904 = vrot.lane.b32.xlu0 %v1533, 16
    %v2905 = vpop.permute.xlu0 %2904
    %2908 = vrot.lane.b32.xlu0 %v1543, 20
    %v2909 = vpop.permute.xlu0 %2908
    %2912 = vrot.lane.b32.xlu0 %v1540, 24
    %v2913 = vpop.permute.xlu0 %2912
    %2916 = vrot.lane.b32.xlu0 %v1544, 28
    %v2917 = vpop.permute.xlu0 %2916
    %2920 = vrot.lane.b32.xlu0 %v1583, 32
    %v2921 = vpop.permute.xlu0 %2920
    %2924 = vrot.lane.b32.xlu0 %v1607, 36
    %v2925 = vpop.permute.xlu0 %2924
    %2928 = vrot.lane.b32.xlu0 %v1590, 40
    %v2929 = vpop.permute.xlu0 %2928
    %2932 = vrot.lane.b32.xlu0 %v1608, 44
    %v2933 = vpop.permute.xlu0 %2932
    %2936 = vrot.lane.b32.xlu0 %v1599, 48
    %v2937 = vpop.permute.xlu0 %2936
    %2940 = vrot.lane.b32.xlu0 %v1609, 52
    %v2941 = vpop.permute.xlu0 %2940
    %2944 = vrot.lane.b32.xlu0 %v1606, 56
    %v2945 = vpop.permute.xlu0 %2944
    %2948 = vrot.lane.b32.xlu0 %v1610, 60
    %v2949 = vpop.permute.xlu0 %2948
    %2952 = vrot.lane.b32.xlu0 %v1649, 64
    %v2953 = vpop.permute.xlu0 %2952
    %2956 = vrot.lane.b32.xlu0 %v1673, 68
    %v2957 = vpop.permute.xlu0 %2956
    %2960 = vrot.lane.b32.xlu0 %v1656, 72
    %v2961 = vpop.permute.xlu0 %2960
    %2964 = vrot.lane.b32.xlu0 %v1674, 76
    %v2965 = vpop.permute.xlu0 %2964
    %2968 = vrot.lane.b32.xlu0 %v1665, 80
    %v2969 = vpop.permute.xlu0 %2968
    %2972 = vrot.lane.b32.xlu0 %v1675, 84
    %v2973 = vpop.permute.xlu0 %2972
    %2976 = vrot.lane.b32.xlu0 %v1672, 88
    %v2977 = vpop.permute.xlu0 %2976
    %2980 = vrot.lane.b32.xlu0 %v1676, 92
    %v2981 = vpop.permute.xlu0 %2980
    %2984 = vrot.lane.b32.xlu0 %v1715, 96
    %v2985 = vpop.permute.xlu0 %2984
    %2988 = vrot.lane.b32.xlu0 %v1739, 100
    %v2989 = vpop.permute.xlu0 %2988
    %2992 = vrot.lane.b32.xlu0 %v1722, 104
    %v2993 = vpop.permute.xlu0 %2992
    %2996 = vrot.lane.b32.xlu0 %v1740, 108
    %v2997 = vpop.permute.xlu0 %2996
    %3000 = vrot.lane.b32.xlu0 %v1731, 112
    %v3001 = vpop.permute.xlu0 %3000
    %3004 = vrot.lane.b32.xlu0 %v1741, 116
    %v3005 = vpop.permute.xlu0 %3004
    %3008 = vrot.lane.b32.xlu0 %v1738, 120
    %v3009 = vpop.permute.xlu0 %3008
    %3012 = vrot.lane.b32.xlu0 %v1742, 124
    %v3013 = vpop.permute.xlu0 %3012
    %3016 = vrot.lane.b32.xlu0 %v1805, 4
    %v3017 = vpop.permute.xlu0 %3016
    %3020 = vrot.lane.b32.xlu0 %v1788, 8
    %v3021 = vpop.permute.xlu0 %3020
    %3024 = vrot.lane.b32.xlu0 %v1806, 12
    %v3025 = vpop.permute.xlu0 %3024
    %3028 = vrot.lane.b32.xlu0 %v1797, 16
    %v3029 = vpop.permute.xlu0 %3028
    %3032 = vrot.lane.b32.xlu0 %v1807, 20
    %v3033 = vpop.permute.xlu0 %3032
    %3036 = vrot.lane.b32.xlu0 %v1804, 24
    %v3037 = vpop.permute.xlu0 %3036
    %3040 = vrot.lane.b32.xlu0 %v1808, 28
    %v3041 = vpop.permute.xlu0 %3040
    %3044 = vrot.lane.b32.xlu0 %v1847, 32
    %v3045 = vpop.permute.xlu0 %3044
    %3048 = vrot.lane.b32.xlu0 %v1871, 36
    %v3049 = vpop.permute.xlu0 %3048
    %3052 = vrot.lane.b32.xlu0 %v1854, 40
    %v3053 = vpop.permute.xlu0 %3052
    %3056 = vrot.lane.b32.xlu0 %v1872, 44
    %v3057 = vpop.permute.xlu0 %3056
    %3060 = vrot.lane.b32.xlu0 %v1863, 48
    %v3061 = vpop.permute.xlu0 %3060
    %3064 = vrot.lane.b32.xlu0 %v1873, 52
    %v3065 = vpop.permute.xlu0 %3064
    %3068 = vrot.lane.b32.xlu0 %v1870, 56
    %v3069 = vpop.permute.xlu0 %3068
    %3072 = vrot.lane.b32.xlu0 %v1874, 60
    %v3073 = vpop.permute.xlu0 %3072
    %3076 = vrot.lane.b32.xlu0 %v1913, 64
    %v3077 = vpop.permute.xlu0 %3076
    %3080 = vrot.lane.b32.xlu0 %v1937, 68
    %v3081 = vpop.permute.xlu0 %3080
    %3084 = vrot.lane.b32.xlu0 %v1920, 72
    %v3085 = vpop.permute.xlu0 %3084
    %3088 = vrot.lane.b32.xlu0 %v1938, 76
    %v3089 = vpop.permute.xlu0 %3088
    %3092 = vrot.lane.b32.xlu0 %v1929, 80
    %v3093 = vpop.permute.xlu0 %3092
    %3096 = vrot.lane.b32.xlu0 %v1939, 84
    %v3097 = vpop.permute.xlu0 %3096
    %3100 = vrot.lane.b32.xlu0 %v1936, 88
    %v3101 = vpop.permute.xlu0 %3100
    %3104 = vrot.lane.b32.xlu0 %v1940, 92
    %v3105 = vpop.permute.xlu0 %3104
    %3108 = vrot.lane.b32.xlu0 %v1979, 96
    %v3109 = vpop.permute.xlu0 %3108
    %3112 = vrot.lane.b32.xlu0 %v2003, 100
    %v3113 = vpop.permute.xlu0 %3112
    %3116 = vrot.lane.b32.xlu0 %v1986, 104
    %v3117 = vpop.permute.xlu0 %3116
    %3120 = vrot.lane.b32.xlu0 %v2004, 108
    %v3121 = vpop.permute.xlu0 %3120
    %3124 = vrot.lane.b32.xlu0 %v1995, 112
    %v3125 = vpop.permute.xlu0 %3124
    %3128 = vrot.lane.b32.xlu0 %v2005, 116
    %v3129 = vpop.permute.xlu0 %3128
    %3132 = vrot.lane.b32.xlu0 %v2002, 120
    %v3133 = vpop.permute.xlu0 %3132
    %3136 = vrot.lane.b32.xlu0 %v2006, 124
    %v3137 = vpop.permute.xlu0 %3136
    %3140 = vrot.lane.b32.xlu0 %v2069, 4
    %v3141 = vpop.permute.xlu0 %3140
    %3144 = vrot.lane.b32.xlu0 %v2052, 8
    %v3145 = vpop.permute.xlu0 %3144
    %3148 = vrot.lane.b32.xlu0 %v2070, 12
    %v3149 = vpop.permute.xlu0 %3148
    %3152 = vrot.lane.b32.xlu0 %v2061, 16
    %v3153 = vpop.permute.xlu0 %3152
    %3156 = vrot.lane.b32.xlu0 %v2071, 20
    %v3157 = vpop.permute.xlu0 %3156
    %3160 = vrot.lane.b32.xlu0 %v2068, 24
    %v3161 = vpop.permute.xlu0 %3160
    %3164 = vrot.lane.b32.xlu0 %v2072, 28
    %v3165 = vpop.permute.xlu0 %3164
    %3168 = vrot.lane.b32.xlu0 %v2111, 32
    %v3169 = vpop.permute.xlu0 %3168
    %3172 = vrot.lane.b32.xlu0 %v2135, 36
    %v3173 = vpop.permute.xlu0 %3172
    %3176 = vrot.lane.b32.xlu0 %v2118, 40
    %v3177 = vpop.permute.xlu0 %3176
    %3180 = vrot.lane.b32.xlu0 %v2136, 44
    %v3181 = vpop.permute.xlu0 %3180
    %3184 = vrot.lane.b32.xlu0 %v2127, 48
    %v3185 = vpop.permute.xlu0 %3184
    %3188 = vrot.lane.b32.xlu0 %v2137, 52
    %v3189 = vpop.permute.xlu0 %3188
    %3192 = vrot.lane.b32.xlu0 %v2134, 56
    %v3193 = vpop.permute.xlu0 %3192
    %3196 = vrot.lane.b32.xlu0 %v2138, 60
    %v3197 = vpop.permute.xlu0 %3196
    %3200 = vrot.lane.b32.xlu0 %v2177, 64
    %v3201 = vpop.permute.xlu0 %3200
    %3204 = vrot.lane.b32.xlu0 %v2201, 68
    %v3205 = vpop.permute.xlu0 %3204
    %3208 = vrot.lane.b32.xlu0 %v2184, 72
    %v3209 = vpop.permute.xlu0 %3208
    %3212 = vrot.lane.b32.xlu0 %v2202, 76
    %v3213 = vpop.permute.xlu0 %3212
    %3216 = vrot.lane.b32.xlu0 %v2193, 80
    %v3217 = vpop.permute.xlu0 %3216
    %3220 = vrot.lane.b32.xlu0 %v2203, 84
    %v3221 = vpop.permute.xlu0 %3220
    %3224 = vrot.lane.b32.xlu0 %v2200, 88
    %v3225 = vpop.permute.xlu0 %3224
    %3228 = vrot.lane.b32.xlu0 %v2204, 92
    %v3229 = vpop.permute.xlu0 %3228
    %3232 = vrot.lane.b32.xlu0 %v2243, 96
    %v3233 = vpop.permute.xlu0 %3232
    %3236 = vrot.lane.b32.xlu0 %v2267, 100
    %v3237 = vpop.permute.xlu0 %3236
    %3240 = vrot.lane.b32.xlu0 %v2250, 104
    %v3241 = vpop.permute.xlu0 %3240
    %3244 = vrot.lane.b32.xlu0 %v2268, 108
    %v3245 = vpop.permute.xlu0 %3244
    %3248 = vrot.lane.b32.xlu0 %v2259, 112
    %v3249 = vpop.permute.xlu0 %3248
    %3252 = vrot.lane.b32.xlu0 %v2269, 116
    %v3253 = vpop.permute.xlu0 %3252
    %3256 = vrot.lane.b32.xlu0 %v2266, 120
    %v3257 = vpop.permute.xlu0 %3256
    %3260 = vrot.lane.b32.xlu0 %v2270, 124
    %v3261 = vpop.permute.xlu0 %3260
    %vm3263 = vcmask 31744
    %v3264 = vsel %vm3263, %v197, %v2273
    %vm3265 = vcmask 64512
    %v3266 = vsel %vm3265, %v3264, %v2277
    %vm3267 = vcmask 97280
    %v3268 = vsel %vm3267, %v3266, %v2281
    %vm3269 = vcmask 130048
    %v3270 = vsel %vm3269, %v3268, %v2285
    %vm3271 = vcmask 162816
    %v3272 = vsel %vm3271, %v3270, %v2289
    %vm3273 = vcmask 195584
    %v3274 = vsel %vm3273, %v3272, %v2293
    %vm3275 = vcmask 228352
    %v3276 = vsel %vm3275, %v3274, %v2297
    %vm3277 = vcmask 261120
    %v3278 = vsel %vm3277, %v3276, %v2301
    %vm3279 = vcmask 293888
    %v3280 = vsel %vm3279, %v3278, %v2305
    %vm3281 = vcmask 326656
    %v3282 = vsel %vm3281, %v3280, %v2309
    %vm3283 = vcmask 359424
    %v3284 = vsel %vm3283, %v3282, %v2313
    %vm3285 = vcmask 392192
    %v3286 = vsel %vm3285, %v3284, %v2317
    %vm3287 = vcmask 424960
    %v3288 = vsel %vm3287, %v3286, %v2321
    %vm3289 = vcmask 457728
    %v3290 = vsel %vm3289, %v3288, %v2325
    %vm3291 = vcmask 490496
    %v3292 = vsel %vm3291, %v3290, %v2329
    %vm3293 = vcmask 523264
    %v3294 = vsel %vm3293, %v3292, %v2333
    %vm3295 = vcmask 556032
    %v3296 = vsel %vm3295, %v3294, %v2337
    %vm3297 = vcmask 588800
    %v3298 = vsel %vm3297, %v3296, %v2341
    %vm3299 = vcmask 621568
    %v3300 = vsel %vm3299, %v3298, %v2345
    %vm3301 = vcmask 654336
    %v3302 = vsel %vm3301, %v3300, %v2349
    %vm3303 = vcmask 687104
    %v3304 = vsel %vm3303, %v3302, %v2353
    %vm3305 = vcmask 719872
    %v3306 = vsel %vm3305, %v3304, %v2357
    %vm3307 = vcmask 752640
    %v3308 = vsel %vm3307, %v3306, %v2361
    %vm3309 = vcmask 785408
    %v3310 = vsel %vm3309, %v3308, %v2365
    %vm3311 = vcmask 818176
    %v3312 = vsel %vm3311, %v3310, %v2369
    %vm3313 = vcmask 850944
    %v3314 = vsel %vm3313, %v3312, %v2373
    %vm3315 = vcmask 883712
    %v3316 = vsel %vm3315, %v3314, %v2377
    %vm3317 = vcmask 916480
    %v3318 = vsel %vm3317, %v3316, %v2381
    %vm3319 = vcmask 949248
    %v3320 = vsel %vm3319, %v3318, %v2385
    %vm3321 = vcmask 982016
    %v3322 = vsel %vm3321, %v3320, %v2389
    %vm3323 = vcmask 1014784
    %v3324 = vsel %vm3323, %v3322, %v2393
    %v3325 = vsel %vm3263, %v461, %v2397
    %v3326 = vsel %vm3265, %v3325, %v2401
    %v3327 = vsel %vm3267, %v3326, %v2405
    %v3328 = vsel %vm3269, %v3327, %v2409
    %v3329 = vsel %vm3271, %v3328, %v2413
    %v3330 = vsel %vm3273, %v3329, %v2417
    %v3331 = vsel %vm3275, %v3330, %v2421
    %v3332 = vsel %vm3277, %v3331, %v2425
    %v3333 = vsel %vm3279, %v3332, %v2429
    %v3334 = vsel %vm3281, %v3333, %v2433
    %v3335 = vsel %vm3283, %v3334, %v2437
    %v3336 = vsel %vm3285, %v3335, %v2441
    %v3337 = vsel %vm3287, %v3336, %v2445
    %v3338 = vsel %vm3289, %v3337, %v2449
    %v3339 = vsel %vm3291, %v3338, %v2453
    %v3340 = vsel %vm3293, %v3339, %v2457
    %v3341 = vsel %vm3295, %v3340, %v2461
    %v3342 = vsel %vm3297, %v3341, %v2465
    %v3343 = vsel %vm3299, %v3342, %v2469
    %v3344 = vsel %vm3301, %v3343, %v2473
    %v3345 = vsel %vm3303, %v3344, %v2477
    %v3346 = vsel %vm3305, %v3345, %v2481
    %v3347 = vsel %vm3307, %v3346, %v2485
    %v3348 = vsel %vm3309, %v3347, %v2489
    %v3349 = vsel %vm3311, %v3348, %v2493
    %v3350 = vsel %vm3313, %v3349, %v2497
    %v3351 = vsel %vm3315, %v3350, %v2501
    %v3352 = vsel %vm3317, %v3351, %v2505
    %v3353 = vsel %vm3319, %v3352, %v2509
    %v3354 = vsel %vm3321, %v3353, %v2513
    %v3355 = vsel %vm3323, %v3354, %v2517
    %v3356 = vsel %vm3263, %v725, %v2521
    %v3357 = vsel %vm3265, %v3356, %v2525
    %v3358 = vsel %vm3267, %v3357, %v2529
    %v3359 = vsel %vm3269, %v3358, %v2533
    %v3360 = vsel %vm3271, %v3359, %v2537
    %v3361 = vsel %vm3273, %v3360, %v2541
    %v3362 = vsel %vm3275, %v3361, %v2545
    %v3363 = vsel %vm3277, %v3362, %v2549
    %v3364 = vsel %vm3279, %v3363, %v2553
    %v3365 = vsel %vm3281, %v3364, %v2557
    %v3366 = vsel %vm3283, %v3365, %v2561
    %v3367 = vsel %vm3285, %v3366, %v2565
    %v3368 = vsel %vm3287, %v3367, %v2569
    %v3369 = vsel %vm3289, %v3368, %v2573
    %v3370 = vsel %vm3291, %v3369, %v2577
    %v3371 = vsel %vm3293, %v3370, %v2581
    %v3372 = vsel %vm3295, %v3371, %v2585
    %v3373 = vsel %vm3297, %v3372, %v2589
    %v3374 = vsel %vm3299, %v3373, %v2593
    %v3375 = vsel %vm3301, %v3374, %v2597
    %v3376 = vsel %vm3303, %v3375, %v2601
    %v3377 = vsel %vm3305, %v3376, %v2605
    %v3378 = vsel %vm3307, %v3377, %v2609
    %v3379 = vsel %vm3309, %v3378, %v2613
    %v3380 = vsel %vm3311, %v3379, %v2617
    %v3381 = vsel %vm3313, %v3380, %v2621
    %v3382 = vsel %vm3315, %v3381, %v2625
    %v3383 = vsel %vm3317, %v3382, %v2629
    %v3384 = vsel %vm3319, %v3383, %v2633
    %v3385 = vsel %vm3321, %v3384, %v2637
    %v3386 = vsel %vm3323, %v3385, %v2641
    %v3387 = vsel %vm3263, %v989, %v2645
    %v3388 = vsel %vm3265, %v3387, %v2649
    %v3389 = vsel %vm3267, %v3388, %v2653
    %v3390 = vsel %vm3269, %v3389, %v2657
    %v3391 = vsel %vm3271, %v3390, %v2661
    %v3392 = vsel %vm3273, %v3391, %v2665
    %v3393 = vsel %vm3275, %v3392, %v2669
    %v3394 = vsel %vm3277, %v3393, %v2673
    %v3395 = vsel %vm3279, %v3394, %v2677
    %v3396 = vsel %vm3281, %v3395, %v2681
    %v3397 = vsel %vm3283, %v3396, %v2685
    %v3398 = vsel %vm3285, %v3397, %v2689
    %v3399 = vsel %vm3287, %v3398, %v2693
    %v3400 = vsel %vm3289, %v3399, %v2697
    %v3401 = vsel %vm3291, %v3400, %v2701
    %v3402 = vsel %vm3293, %v3401, %v2705
    %v3403 = vsel %vm3295, %v3402, %v2709
    %v3404 = vsel %vm3297, %v3403, %v2713
    %v3405 = vsel %vm3299, %v3404, %v2717
    %v3406 = vsel %vm3301, %v3405, %v2721
    %v3407 = vsel %vm3303, %v3406, %v2725
    %v3408 = vsel %vm3305, %v3407, %v2729
    %v3409 = vsel %vm3307, %v3408, %v2733
    %v3410 = vsel %vm3309, %v3409, %v2737
    %v3411 = vsel %vm3311, %v3410, %v2741
    %v3412 = vsel %vm3313, %v3411, %v2745
    %v3413 = vsel %vm3315, %v3412, %v2749
    %v3414 = vsel %vm3317, %v3413, %v2753
    %v3415 = vsel %vm3319, %v3414, %v2757
    %v3416 = vsel %vm3321, %v3415, %v2761
    %v3417 = vsel %vm3323, %v3416, %v2765
    %v3418 = vsel %vm3263, %v1253, %v2769
    %v3419 = vsel %vm3265, %v3418, %v2773
    %v3420 = vsel %vm3267, %v3419, %v2777
    %v3421 = vsel %vm3269, %v3420, %v2781
    %v3422 = vsel %vm3271, %v3421, %v2785
    %v3423 = vsel %vm3273, %v3422, %v2789
    %v3424 = vsel %vm3275, %v3423, %v2793
    %v3425 = vsel %vm3277, %v3424, %v2797
    %v3426 = vsel %vm3279, %v3425, %v2801
    %v3427 = vsel %vm3281, %v3426, %v2805
    %v3428 = vsel %vm3283, %v3427, %v2809
    %v3429 = vsel %vm3285, %v3428, %v2813
    %v3430 = vsel %vm3287, %v3429, %v2817
    %v3431 = vsel %vm3289, %v3430, %v2821
    %v3432 = vsel %vm3291, %v3431, %v2825
    %v3433 = vsel %vm3293, %v3432, %v2829
    %v3434 = vsel %vm3295, %v3433, %v2833
    %v3435 = vsel %vm3297, %v3434, %v2837
    %v3436 = vsel %vm3299, %v3435, %v2841
    %v3437 = vsel %vm3301, %v3436, %v2845
    %v3438 = vsel %vm3303, %v3437, %v2849
    %v3439 = vsel %vm3305, %v3438, %v2853
    %v3440 = vsel %vm3307, %v3439, %v2857
    %v3441 = vsel %vm3309, %v3440, %v2861
    %v3442 = vsel %vm3311, %v3441, %v2865
    %v3443 = vsel %vm3313, %v3442, %v2869
    %v3444 = vsel %vm3315, %v3443, %v2873
    %v3445 = vsel %vm3317, %v3444, %v2877
    %v3446 = vsel %vm3319, %v3445, %v2881
    %v3447 = vsel %vm3321, %v3446, %v2885
    %v3448 = vsel %vm3323, %v3447, %v2889
    %v3449 = vsel %vm3263, %v1517, %v2893
    %v3450 = vsel %vm3265, %v3449, %v2897
    %v3451 = vsel %vm3267, %v3450, %v2901
    %v3452 = vsel %vm3269, %v3451, %v2905
    %v3453 = vsel %vm3271, %v3452, %v2909
    %v3454 = vsel %vm3273, %v3453, %v2913
    %v3455 = vsel %vm3275, %v3454, %v2917
    %v3456 = vsel %vm3277, %v3455, %v2921
    %v3457 = vsel %vm3279, %v3456, %v2925
    %v3458 = vsel %vm3281, %v3457, %v2929
    %v3459 = vsel %vm3283, %v3458, %v2933
    %v3460 = vsel %vm3285, %v3459, %v2937
    %v3461 = vsel %vm3287, %v3460, %v2941
    %v3462 = vsel %vm3289, %v3461, %v2945
    %v3463 = vsel %vm3291, %v3462, %v2949
    %v3464 = vsel %vm3293, %v3463, %v2953
    %v3465 = vsel %vm3295, %v3464, %v2957
    %v3466 = vsel %vm3297, %v3465, %v2961
    %v3467 = vsel %vm3299, %v3466, %v2965
    %v3468 = vsel %vm3301, %v3467, %v2969
    %v3469 = vsel %vm3303, %v3468, %v2973
    %v3470 = vsel %vm3305, %v3469, %v2977
    %v3471 = vsel %vm3307, %v3470, %v2981
    %v3472 = vsel %vm3309, %v3471, %v2985
    %v3473 = vsel %vm3311, %v3472, %v2989
    %v3474 = vsel %vm3313, %v3473, %v2993
    %v3475 = vsel %vm3315, %v3474, %v2997
    %v3476 = vsel %vm3317, %v3475, %v3001
    %v3477 = vsel %vm3319, %v3476, %v3005
    %v3478 = vsel %vm3321, %v3477, %v3009
    %v3479 = vsel %vm3323, %v3478, %v3013
    %v3480 = vsel %vm3263, %v1781, %v3017
    %v3481 = vsel %vm3265, %v3480, %v3021
    %v3482 = vsel %vm3267, %v3481, %v3025
    %v3483 = vsel %vm3269, %v3482, %v3029
    %v3484 = vsel %vm3271, %v3483, %v3033
    %v3485 = vsel %vm3273, %v3484, %v3037
    %v3486 = vsel %vm3275, %v3485, %v3041
    %v3487 = vsel %vm3277, %v3486, %v3045
    %v3488 = vsel %vm3279, %v3487, %v3049
    %v3489 = vsel %vm3281, %v3488, %v3053
    %v3490 = vsel %vm3283, %v3489, %v3057
    %v3491 = vsel %vm3285, %v3490, %v3061
    %v3492 = vsel %vm3287, %v3491, %v3065
    %v3493 = vsel %vm3289, %v3492, %v3069
    %v3494 = vsel %vm3291, %v3493, %v3073
    %v3495 = vsel %vm3293, %v3494, %v3077
    %v3496 = vsel %vm3295, %v3495, %v3081
    %v3497 = vsel %vm3297, %v3496, %v3085
    %v3498 = vsel %vm3299, %v3497, %v3089
    %v3499 = vsel %vm3301, %v3498, %v3093
    %v3500 = vsel %vm3303, %v3499, %v3097
    %v3501 = vsel %vm3305, %v3500, %v3101
    %v3502 = vsel %vm3307, %v3501, %v3105
    %v3503 = vsel %vm3309, %v3502, %v3109
    %v3504 = vsel %vm3311, %v3503, %v3113
    %v3505 = vsel %vm3313, %v3504, %v3117
    %v3506 = vsel %vm3315, %v3505, %v3121
    %v3507 = vsel %vm3317, %v3506, %v3125
    %v3508 = vsel %vm3319, %v3507, %v3129
    %v3509 = vsel %vm3321, %v3508, %v3133
    %v3510 = vsel %vm3323, %v3509, %v3137
    %v3511 = vsel %vm3263, %v2045, %v3141
    %v3512 = vsel %vm3265, %v3511, %v3145
    %v3513 = vsel %vm3267, %v3512, %v3149
    %v3514 = vsel %vm3269, %v3513, %v3153
    %v3515 = vsel %vm3271, %v3514, %v3157
    %v3516 = vsel %vm3273, %v3515, %v3161
    %v3517 = vsel %vm3275, %v3516, %v3165
    %v3518 = vsel %vm3277, %v3517, %v3169
    %v3519 = vsel %vm3279, %v3518, %v3173
    %v3520 = vsel %vm3281, %v3519, %v3177
    %v3521 = vsel %vm3283, %v3520, %v3181
    %v3522 = vsel %vm3285, %v3521, %v3185
    %v3523 = vsel %vm3287, %v3522, %v3189
    %v3524 = vsel %vm3289, %v3523, %v3193
    %v3525 = vsel %vm3291, %v3524, %v3197
    %v3526 = vsel %vm3293, %v3525, %v3201
    %v3527 = vsel %vm3295, %v3526, %v3205
    %v3528 = vsel %vm3297, %v3527, %v3209
    %v3529 = vsel %vm3299, %v3528, %v3213
    %v3530 = vsel %vm3301, %v3529, %v3217
    %v3531 = vsel %vm3303, %v3530, %v3221
    %v3532 = vsel %vm3305, %v3531, %v3225
    %v3533 = vsel %vm3307, %v3532, %v3229
    %v3534 = vsel %vm3309, %v3533, %v3233
    %v3535 = vsel %vm3311, %v3534, %v3237
    %v3536 = vsel %vm3313, %v3535, %v3241
    %v3537 = vsel %vm3315, %v3536, %v3245
    %v3538 = vsel %vm3317, %v3537, %v3249
    %v3539 = vsel %vm3319, %v3538, %v3253
    %v3540 = vsel %vm3321, %v3539, %v3257
    %v3541 = vsel %vm3323, %v3540, %v3261
    %v3550 = vcombine.low %v3324, %v3355
    %v3551 = vcombine.low %v3386, %v3417
    %v3553 = vunpack.c.l.s4 1983009808
    %v3554 = vunpack.c.0.s8 %v3553
    %v3555 = vlaneseq
    %v3556 = vshrl.u32 %v3555, 7
    %v3557 = vsub.s32 %v3554, %v3556
    %v3558 = vrot.slane %v3550, %v3557
    %v3560 = vunpack.c.l.s4 1983009808
    %v3561 = vunpack.c.0.s8 %v3560
    %v3562 = vlaneseq
    %v3563 = vshrl.u32 %v3562, 7
    %v3564 = vsub.s32 %v3561, %v3563
    %v3565 = vrot.slane %v3551, %v3564
    %v3566 = vcombine.low %v3558, %v3565
    %v3567 = vcombine.low %v3448, %v3479
    %v3568 = vcombine.low %v3510, %v3541
    %v3570 = vunpack.c.l.s4 1983009808
    %v3571 = vunpack.c.0.s8 %v3570
    %v3572 = vlaneseq
    %v3573 = vshrl.u32 %v3572, 7
    %v3574 = vsub.s32 %v3571, %v3573
    %v3575 = vrot.slane %v3567, %v3574
    %v3577 = vunpack.c.l.s4 1983009808
    %v3578 = vunpack.c.0.s8 %v3577
    %v3579 = vlaneseq
    %v3580 = vshrl.u32 %v3579, 7
    %v3581 = vsub.s32 %v3578, %v3580
    %v3582 = vrot.slane %v3568, %v3581
    %v3583 = vcombine.low %v3575, %v3582
    %3586 = vst [vmem:[#allocation5] sm:$0xff] %v3566
    %3587 = vst [vmem:[#allocation5 + $0x8] sm:$0xff] %v3583
    // Predicated region
    $region10: #{tpu_custom_call.1} parent=1 // pred_check
      _
    $region11: #{tpu_custom_call.1} parent=1 // pred_check_branch
      %3589 = sbr.rel (0) target = $region13
    $region12: #{tpu_custom_call.1} parent=1 // pred_region
      %s3591 = ssub.s32 256, 256
      %3592 = vsyncadd [#allocation4], %s3591
      %s3594 = sshll.u32 [#allocation5], 4
      %s3595 = int_to_ptr.vmem [resolvable:$true] %s3594
      %3597 = dma.vmem_to_hbm [thread:$0]  %s3595, 256, %s1, [#allocation4]
    $region13: #{tpu_custom_call.1} parent=1 // pred_fallthru
      _
    // Predicated region
    $region14: #{tpu_custom_call.1} parent=1 // pred_check
      _
    $region15: #{tpu_custom_call.1} parent=1 // pred_check_branch
      %3599 = sbr.rel (0) target = $region17
    $region16: #{tpu_custom_call.1} parent=1 // pred_region
      %3600 = dma.done [#allocation4], 256
    $region17: #{tpu_custom_call.1} parent=1 // pred_fallthru
      _
    %3601 = vsyncpa [#allocation3], 1
    %3602 = vsyncpa [#allocation4], 1

</llo_original>
